<compile_context>
chip_gen: v5e
topology: v5e:2x2
jax: 0.10.0
libtpu: 0.0.40
codegen_flags: <defaults>
</compile_context>

<pallas_src>
import functools

import jax
import jax.numpy as jnp
from jax.experimental import pallas as pl
from jax.experimental.pallas import tpu as pltpu

LANE = 128


def _round_up(v, m):
    return ((v + m - 1) // m) * m


def _vmem_capacity_bytes():
    """Physical VMEM capacity of the current chip (fallback: v7x 64 MiB)."""
    try:
        info = pltpu.get_tpu_info()
        cap = getattr(info, "vmem_capacity_bytes", None)
        if cap:
            return int(cap)
    except Exception:
        pass
    return 64 * 1024 * 1024


def _divisor_tiles(n_pad, candidates):
    return [t for t in candidates if t <= n_pad and n_pad % t == 0]


def _pick_tm_norm(n_pad, dp, k0, budget):
    """Row tile for the f32-heavy normalization pre-pass.  Must be a multiple
    of 128 (the column-stripe block has it on the lane axis)."""
    for tm in _divisor_tiles(n_pad, (512, 256, 128)):
        est = (tm * n_pad * 24        # 2 bf16 adj streams (2 bufs) + a_left out + f32 temps
               + tm * dp * 12         # x stream + f32 temp
               + tm * k0 * 4)         # r0 out (bf16, 2 bufs)
        if est <= budget:
            return tm
    return 128


def _pick_layer_tiles(n_pad, kin, kout, budget):
    """(row tile, K tile) for the K-tiled layer passes."""
    for tm in _divisor_tiles(n_pad, (2048, 1024, 512, 256, 128)):
        for tk in _divisor_tiles(n_pad, (1024, 512, 256, 128)):
            est = (4 * tm * tk          # a_left stream (bf16, 2 bufs)
                   + 4 * tk * kin       # feature stream (bf16, 2 bufs)
                   + 4 * tm * kin       # f32 accumulator scratch
                   + 8 * tm * kout      # output (2 bufs) + finalize temps
                   + 4 * tm * tk)       # pipelining headroom
            if est <= budget:
                return tm, tk
    return 128, 128


# --------------------------------------------------------------------------
# Pass 1: Kipf normalization (row-scaled adjacency) + D^-1/2-scaled
#         (optionally W0-projected) features.
# --------------------------------------------------------------------------
def _normalize_kernel(adjr_ref, adjc_ref, x_ref, *refs, tm, project):
    if project:
        w0_ref, a_ref, dis_ref, r0_ref = refs
    else:
        a_ref, dis_ref, r0_ref = refs
        w0_ref = None

    i = pl.program_id(0)
    n = adjr_ref.shape[1]
    row = i * tm + jax.lax.broadcasted_iota(jnp.int32, (tm, n), 0)
    col = jax.lax.broadcasted_iota(jnp.int32, (tm, n), 1)

    a = adjr_ref[...].astype(jnp.float32)                    # adj[rows, :]
    # Column stripe adj[:, rows] transposed in-kernel == adj.T[rows, :].
    at = jnp.transpose(adjc_ref[...].astype(jnp.float32))
    # sym = triu(adj, 1) + triu(adj, 1).T with unit diagonal (nested select).
    sym = jnp.where(col > row, a, jnp.where(col < row, at, 1.0))

    # Degree reduction stays in f32 even though the adjacency input is bf16.
    dis = jax.lax.rsqrt(jnp.sum(sym, axis=1, keepdims=True))  # D^-1/2, [tm,1]
    dis_ref[...] = dis
    # Row scaling only; the column D^-1/2 is folded into the feature operand.
    a_ref[...] = (sym * dis).astype(a_ref.dtype)

    xs = x_ref[...] * dis                                     # D^-1/2 x
    if project:   # layer-0 reorder: project to n_filters before the A matmul
        r0_ref[...] = jnp.dot(xs.astype(jnp.bfloat16), w0_ref[...],
                              preferred_element_type=jnp.float32
                              ).astype(r0_ref.dtype)
    else:
        r0_ref[...] = xs.astype(r0_ref.dtype)


# --------------------------------------------------------------------------
# Pass 2: layer 0 (GCN + ReLU), K-tiled over nodes; emits D^-1/2 * h
#         (optionally pre-projected by W1).
# --------------------------------------------------------------------------
def _gcn_layer0_kernel(a_ref, r0_ref, dis_ref, *refs, fold_w0, project_w1):
    idx = 0
    w0_ref = w1_ref = None
    if fold_w0:
        w0_ref = refs[idx]; idx += 1
    if project_w1:
        w1_ref = refs[idx]; idx += 1
    out_ref = refs[idx]
    acc_ref = refs[idx + 1]

    k = pl.program_id(1)

    @pl.when(k == 0)
    def _():
        acc_ref[...] = jnp.zeros_like(acc_ref)

    # bf16 operands, f32 accumulation on the MXU.
    acc_ref[...] += jnp.dot(a_ref[...], r0_ref[...],
                            preferred_element_type=jnp.float32)

    @pl.when(k == pl.num_programs(1) - 1)
    def _():
        t = acc_ref[...]
        if fold_w0:
            t = jnp.dot(t.astype(jnp.bfloat16), w0_ref[...],
                        preferred_element_type=jnp.float32)
        h = jnp.maximum(t, 0.0)                    # ReLU
        # TODO(synk): Dropout(p=0.5) is identity in eval mode (not implemented).
        hs = h * dis_ref[...]                      # fold D^-1/2 for layer 1
        if project_w1:                             # layer-1 reorder
            hs = jnp.dot(hs.astype(jnp.bfloat16), w1_ref[...],
                         preferred_element_type=jnp.float32)
        out_ref[...] = hs.astype(out_ref.dtype)


# --------------------------------------------------------------------------
# Pass 3: layer 1 (GCN), K-tiled, + masked log_softmax over the lane-dense
#         class dim.
# --------------------------------------------------------------------------
def _gcn_layer1_kernel(a_ref, r1_ref, *refs, fold_w1, n_classes):
    if fold_w1:
        w1_ref, out_ref, acc_ref = refs
    else:
        out_ref, acc_ref = refs
        w1_ref = None

    k = pl.program_id(1)

    @pl.when(k == 0)
    def _():
        acc_ref[...] = jnp.zeros_like(acc_ref)

    acc_ref[...] += jnp.dot(a_ref[...], r1_ref[...],
                            preferred_element_type=jnp.float32)

    @pl.when(k == pl.num_programs(1) - 1)
    def _():
        z = acc_ref[...]
        if fold_w1:
            z = jnp.dot(z.astype(jnp.bfloat16), w1_ref[...],
                        preferred_element_type=jnp.float32)
        # Padded class columns -> -inf so they are excluded from the reduction.
        col = jax.lax.broadcasted_iota(jnp.int32, z.shape, 1)
        zm = jnp.where(col < n_classes, z, -jnp.inf)
        z_max = jnp.max(zm, axis=1, keepdims=True)
        zs = zm - z_max
        lse = jnp.log(jnp.sum(jnp.exp(zs), axis=1, keepdims=True))
        # Write 0 (not -inf) into padded class columns of the padded buffer.
        out_ref[...] = jnp.where(col < n_classes, zs - lse, 0.0
                                 ).astype(out_ref.dtype)


# --------------------------------------------------------------------------
# Wrapper
# --------------------------------------------------------------------------
def dense_gcn_forward(x, adj, w0, w1):
    """Eval-mode DenseGCN forward.

    x:   [n, n_features] f32
    adj: [n, n]          f32 (weighted, possibly asymmetric; triu is used)
    w0:  [n_filters, n_features]  (PyTorch nn.Linear layout, bias=False)
    w1:  [n_classes, n_filters]
    Returns log-probabilities [n, n_classes] (f32).
    """
    n, d = x.shape
    f = w0.shape[0]
    c = w1.shape[0]

    n_pad = _round_up(n, LANE)
    dp, fp, cp = _round_up(d, LANE), _round_up(f, LANE), _round_up(c, LANE)

    vmem_cap = _vmem_capacity_bytes()
    budget = int(vmem_cap * 0.35)           # double-buffered stream budget
    vmem_limit = int(vmem_cap * 0.75)       # scoped VMEM limit, chip-aware

    # Lane-dense, 128-aligned operands.  Adjacency is fed in bf16 (zero-padded
    # rows/cols; the in-kernel unit diagonal keeps padded degrees >= 1).
    x_p = jnp.pad(x.astype(jnp.float32), ((0, n_pad - n), (0, dp - d)))
    adj_p = jnp.pad(adj.astype(jnp.float32),
                    ((0, n_pad - n), (0, n_pad - n))).astype(jnp.bfloat16)
    w0t = jnp.pad(w0.T.astype(jnp.bfloat16), ((0, dp - d), (0, fp - f)))
    w1t = jnp.pad(w1.T.astype(jnp.bfloat16), ((0, fp - f), (0, cp - c)))

    project0 = fp < dp       # apply W0 before the layer-0 adjacency matmul?
    project1 = cp < fp       # apply W1 before the layer-1 adjacency matmul?
    k0 = fp if project0 else dp      # K of layer-0 adjacency matmul result dim
    k1 = cp if project1 else fp      # K of layer-1 adjacency matmul result dim

    # Per-pass tile sizes (decoupled: small for the f32 pre-pass, large for
    # the HBM-bound layer passes).
    tm1 = _pick_tm_norm(n_pad, dp, k0, budget)
    tm2, tk2 = _pick_layer_tiles(n_pad, k0, k1, budget)
    tm3, tk3 = _pick_layer_tiles(n_pad, k1, cp, budget)

    cp_rows = pltpu.CompilerParams(
        dimension_semantics=("parallel",), vmem_limit_bytes=vmem_limit)
    cp_rows_k = pltpu.CompilerParams(
        dimension_semantics=("parallel", "arbitrary"),
        vmem_limit_bytes=vmem_limit)

    # ---- pass 1: normalization pre-pass ---------------------------------
    norm_in = [adj_p, adj_p, x_p] + ([w0t] if project0 else [])
    norm_specs = [
        pl.BlockSpec((tm1, n_pad), lambda i: (i, 0)),    # adj row stripe
        pl.BlockSpec((n_pad, tm1), lambda i: (0, i)),    # adj column stripe
        pl.BlockSpec((tm1, dp), lambda i: (i, 0)),       # x rows
    ] + ([pl.BlockSpec((dp, fp), lambda i: (0, 0))] if project0 else [])
    a_left, dis, r0 = pl.pallas_call(
        functools.partial(_normalize_kernel, tm=tm1, project=project0),
        grid=(n_pad // tm1,),
        in_specs=norm_specs,
        out_specs=(
            pl.BlockSpec((tm1, n_pad), lambda i: (i, 0)),
            pl.BlockSpec((tm1, 1), lambda i: (i, 0)),
            pl.BlockSpec((tm1, k0), lambda i: (i, 0)),
        ),
        out_shape=(
            jax.ShapeDtypeStruct((n_pad, n_pad), jnp.bfloat16),   # D^-1/2 @ S
            jax.ShapeDtypeStruct((n_pad, 1), jnp.float32),        # D^-1/2 diag
            jax.ShapeDtypeStruct((n_pad, k0), jnp.bfloat16),      # scaled feats
        ),
        compiler_params=cp_rows,
    )(*norm_in)

    # ---- pass 2: layer 0 (K-tiled) ---------------------------------------
    l0_in = [a_left, r0, dis]
    l0_specs = [
        pl.BlockSpec((tm2, tk2), lambda i, k: (i, k)),
        pl.BlockSpec((tk2, k0), lambda i, k: (k, 0)),
        pl.BlockSpec((tm2, 1), lambda i, k: (i, 0)),
    ]
    if not project0:
        l0_in.append(w0t)
        l0_specs.append(pl.BlockSpec((dp, fp), lambda i, k: (0, 0)))
    if project1:
        l0_in.append(w1t)
        l0_specs.append(pl.BlockSpec((fp, cp), lambda i, k: (0, 0)))
    r1 = pl.pallas_call(
        functools.partial(_gcn_layer0_kernel,
                          fold_w0=not project0, project_w1=project1),
        grid=(n_pad // tm2, n_pad // tk2),
        in_specs=l0_specs,
        out_specs=pl.BlockSpec((tm2, k1), lambda i, k: (i, 0)),
        out_shape=jax.ShapeDtypeStruct((n_pad, k1), jnp.bfloat16),
        scratch_shapes=[pltpu.VMEM((tm2, k0), jnp.float32)],
        compiler_params=cp_rows_k,
    )(*l0_in)

    # ---- pass 3: layer 1 (K-tiled) + log_softmax --------------------------
    l1_in = [a_left, r1]
    l1_specs = [
        pl.BlockSpec((tm3, tk3), lambda i, k: (i, k)),
        pl.BlockSpec((tk3, k1), lambda i, k: (k, 0)),
    ]
    if not project1:
        l1_in.append(w1t)
        l1_specs.append(pl.BlockSpec((fp, cp), lambda i, k: (0, 0)))
    out_p = pl.pallas_call(
        functools.partial(_gcn_layer1_kernel,
                          fold_w1=not project1, n_classes=c),
        grid=(n_pad // tm3, n_pad // tk3),
        in_specs=l1_specs,
        out_specs=pl.BlockSpec((tm3, cp), lambda i, k: (i, 0)),   # lane-dense
        out_shape=jax.ShapeDtypeStruct((n_pad, cp), jnp.float32),
        scratch_shapes=[pltpu.VMEM((tm3, k1), jnp.float32)],
        compiler_params=cp_rows_k,
    )(*l1_in)

    return out_p[:n, :c]


if __name__ == "__main__":
    n, n_features, n_filters, n_classes = 300, 48, 64, 7

    key = jax.random.PRNGKey(0)
    k_x, k_adj, k_m, k_w0, k_w1 = jax.random.split(key, 5)

    # Sparse-ish weighted adjacency so class scores have visible spread.
    x = 10.0 * jax.random.normal(k_x, (n, n_features), dtype=jnp.float32)
    mask = (jax.random.uniform(k_m, (n, n)) < 0.05).astype(jnp.float32)
    adj = jax.random.uniform(k_adj, (n, n), dtype=jnp.float32) * mask

    # nn.Linear(bias=False)-style init, PyTorch [out, in] layout.
    b0 = 1.0 / jnp.sqrt(jnp.float32(n_features))
    w0 = jax.random.uniform(k_w0, (n_filters, n_features),
                            minval=-b0, maxval=b0, dtype=jnp.float32)
    b1 = 1.0 / jnp.sqrt(jnp.float32(n_filters))
    w1 = jax.random.uniform(k_w1, (n_classes, n_filters),
                            minval=-b1, maxval=b1, dtype=jnp.float32)

    out = dense_gcn_forward(x, adj, w0, w1)
    out = jax.block_until_ready(out)

    # Pure-JAX reference (f32) of the PyTorch module's eval-mode forward.
    def _ref(x, adj, w0, w1):
        nn_ = adj.shape[0]
        triu = jnp.triu(adj, k=1)
        sym = triu + triu.T
        sym = sym.at[jnp.arange(nn_), jnp.arange(nn_)].set(1.0)
        deg = jnp.sum(sym, axis=1) ** -0.5
        a_n = sym * deg[:, None] * deg[None, :]
        h = jax.nn.relu(a_n @ (x @ w0.T))
        z = a_n @ (h @ w1.T)
        return jax.nn.log_softmax(z, axis=1)

    ref = _ref(x, adj, w0, w1)

    assert out.shape == (n, n_classes)
    assert bool(jnp.all(jnp.isfinite(out)))
    # rows of log_softmax must sum (in prob space) to 1
    assert bool(jnp.allclose(jnp.sum(jnp.exp(out), axis=1), 1.0, atol=1e-4))
    # bf16 MXU operands with f32 accumulation -> loose tolerance vs f32 ref.
    assert bool(jnp.allclose(out, ref, atol=1e-1)), "mismatch vs f32 reference"

    print("KERNEL_OK")
</pallas_src>

<mosaic_0001>
module attributes {stable_mosaic.version = 11 : i64} {
  func.func @_normalize_kernel(%arg0: i32, %arg1: memref<128x384xbf16, #tpu.memory_space<vmem>>, %arg2: memref<384x128xbf16, #tpu.memory_space<vmem>>, %arg3: memref<128x128xf32, #tpu.memory_space<vmem>>, %arg4: memref<128x384xbf16, #tpu.memory_space<vmem>>, %arg5: memref<128x1xf32, #tpu.memory_space<vmem>>, %arg6: memref<128x128xbf16, #tpu.memory_space<vmem>>) attributes {dimension_semantics = [#tpu.dimension_semantics<parallel>], iteration_bounds = array<i64: 3>, scalar_prefetch = 0 : i64, scratch_operands = 0 : i64, tpu.core_type = #tpu.core_type<tc>, window_params = [{transform_indices = @transform_0, window_bounds = array<i64: 128, 384>}, {transform_indices = @transform_1, window_bounds = array<i64: 384, 128>}, {transform_indices = @transform_2, window_bounds = array<i64: 128, 128>}, {transform_indices = @transform_3, window_bounds = array<i64: 128, 384>}, {transform_indices = @transform_4, window_bounds = array<i64: 128, 1>}, {transform_indices = @transform_5, window_bounds = array<i64: 128, 128>}]} {
    %c128_i32 = arith.constant 128 : i32
    %0 = arith.muli %arg0, %c128_i32 : i32
    %1 = tpu.iota {dimensions = array<i32: 0>} : vector<128x384xi32>
    %2 = vector.broadcast %0 : i32 to vector<128x384xi32>
    %3 = arith.addi %2, %1 : vector<128x384xi32>
    %4 = tpu.iota {dimensions = array<i32: 1>} : vector<128x384xi32>
    %c0 = arith.constant 0 : index
    %c0_0 = arith.constant 0 : index
    %5 = vector.load %arg1[%c0, %c0_0] : memref<128x384xbf16, #tpu.memory_space<vmem>>, vector<128x384xbf16>
    %6 = arith.extf %5 : vector<128x384xbf16> to vector<128x384xf32>
    %c0_1 = arith.constant 0 : index
    %c0_2 = arith.constant 0 : index
    %7 = vector.load %arg2[%c0_1, %c0_2] : memref<384x128xbf16, #tpu.memory_space<vmem>>, vector<384x128xbf16>
    %8 = arith.extf %7 : vector<384x128xbf16> to vector<384x128xf32>
    %9 = tpu.transpose %8, [1, 0] : vector<384x128xf32> -> vector<128x384xf32>
    %10 = arith.cmpi sgt, %4, %3 : vector<128x384xi32>
    %11 = arith.cmpi slt, %4, %3 : vector<128x384xi32>
    %cst = arith.constant 1.000000e+00 : f32
    %12 = vector.broadcast %cst : f32 to vector<128x384xf32>
    %13 = arith.select %11, %9, %12 : vector<128x384xi1>, vector<128x384xf32>
    %14 = arith.select %10, %6, %13 : vector<128x384xi1>, vector<128x384xf32>
    %cst_3 = arith.constant dense<0.000000e+00> : vector<128xf32>
    %15 = vector.multi_reduction <add>, %14, %cst_3 [1] : vector<128x384xf32> to vector<128xf32>
    %16 = vector.shape_cast %15 : vector<128xf32> to vector<128x1xf32>
    %17 = math.rsqrt %16 : vector<128x1xf32>
    %c0_4 = arith.constant 0 : index
    %c0_5 = arith.constant 0 : index
    %18 = vector.load %arg5[%c0_4, %c0_5] : memref<128x1xf32, #tpu.memory_space<vmem>>, vector<128x1xf32>
    tpu.vector_store %arg5[%c0_4, %c0_5], %17 {strides = array<i32>} : memref<128x1xf32, #tpu.memory_space<vmem>>, vector<128x1xf32>,
    %19 = vector.broadcast %17 : vector<128x1xf32> to vector<128x384xf32>
    %20 = arith.mulf %14, %19 : vector<128x384xf32>
    %21 = arith.truncf %20 : vector<128x384xf32> to vector<128x384xbf16>
    %c0_6 = arith.constant 0 : index
    %c0_7 = arith.constant 0 : index
    %22 = vector.load %arg4[%c0_6, %c0_7] : memref<128x384xbf16, #tpu.memory_space<vmem>>, vector<128x384xbf16>
    tpu.vector_store %arg4[%c0_6, %c0_7], %21 {strides = array<i32>} : memref<128x384xbf16, #tpu.memory_space<vmem>>, vector<128x384xbf16>,
    %c0_8 = arith.constant 0 : index
    %c0_9 = arith.constant 0 : index
    %23 = vector.load %arg3[%c0_8, %c0_9] : memref<128x128xf32, #tpu.memory_space<vmem>>, vector<128x128xf32>
    %24 = vector.broadcast %17 : vector<128x1xf32> to vector<128x128xf32>
    %25 = arith.mulf %23, %24 : vector<128x128xf32>
    %26 = arith.truncf %25 : vector<128x128xf32> to vector<128x128xbf16>
    %c0_10 = arith.constant 0 : index
    %c0_11 = arith.constant 0 : index
    %27 = vector.load %arg6[%c0_10, %c0_11] : memref<128x128xbf16, #tpu.memory_space<vmem>>, vector<128x128xbf16>
    tpu.vector_store %arg6[%c0_10, %c0_11], %26 {strides = array<i32>} : memref<128x128xbf16, #tpu.memory_space<vmem>>, vector<128x128xbf16>,
    return
  }
  func.func @transform_0(%arg0: i32) -> (i32, i32) {
    %c0_i32 = arith.constant 0 : i32
    %c0_i32_0 = arith.constant 0 : i32
    return %arg0, %c0_i32 : i32, i32
  }
  func.func @transform_1(%arg0: i32) -> (i32, i32) {
    %c0_i32 = arith.constant 0 : i32
    %c0_i32_0 = arith.constant 0 : i32
    return %c0_i32, %arg0 : i32, i32
  }
  func.func @transform_2(%arg0: i32) -> (i32, i32) {
    %c0_i32 = arith.constant 0 : i32
    %c0_i32_0 = arith.constant 0 : i32
    return %arg0, %c0_i32 : i32, i32
  }
  func.func @transform_3(%arg0: i32) -> (i32, i32) {
    %c0_i32 = arith.constant 0 : i32
    %c0_i32_0 = arith.constant 0 : i32
    return %arg0, %c0_i32 : i32, i32
  }
  func.func @transform_4(%arg0: i32) -> (i32, i32) {
    %c0_i32 = arith.constant 0 : i32
    %c0_i32_0 = arith.constant 0 : i32
    return %arg0, %c0_i32 : i32, i32
  }
  func.func @transform_5(%arg0: i32) -> (i32, i32) {
    %c0_i32 = arith.constant 0 : i32
    %c0_i32_0 = arith.constant 0 : i32
    return %arg0, %c0_i32 : i32, i32
  }
}

</mosaic_0001>

<llo_original>
// kernel: tpu_custom_call.1
$region0: #{tpu_custom_call.1}
  #allocation0 [shape = 'u32[]', space=smem, size = 0x4, offset = 0x4, fixed_abs, tag = 'smem constant byte address 0x4 - core index']
  #allocation1 [shape = 'u32[72,128]{1,0:T(1,128)}', space=vmem, size = 0x9000, scoped, tag = 'internal scratch']
  %s0 = inlined_call_operand.hbm [shape: bf16[384,384], index: 0, kind: input, shape index: {}]
  %s1 = inlined_call_operand.hbm [shape: bf16[384,384], index: 1, kind: input, shape index: {}]
  %s2 = inlined_call_operand.hbm [shape: f32[384,128], index: 2, kind: input, shape index: {}]
  %s3 = inlined_call_operand.hbm [shape: bf16[384,384], index: 3, kind: output, shape index: {0}]
  %s4 = inlined_call_operand.vmem [shape: f32[384,1], index: 4, kind: output, shape index: {1}]
  %s5 = inlined_call_operand.hbm [shape: bf16[384,128], index: 5, kind: output, shape index: {2}]
  %6 = xla_tuple %s3, %s4, %s5
  %s7 = sld [smem:[#allocation0]]
  $region73: #{tpu_custom_call.1} parent=0
    _
  %s9 = ssub.s32 1, %s7
  %s10 = scalar_select 0, %s9, %s7
  $region1: #{tpu_custom_call.1} parent=0
    #allocation2 [shape = 'u8[196608]{0}', space=vmem, size = 0x30000, scoped, tag = 'input window, operand 0']
    #allocation3 [shape = 's32[2]{0}', space=sflag, size = 0x8, scoped, tag = 'scoped memory for tpu_custom_call.1']
    #allocation4 [shape = 's32[2]{0}', space=sflag, size = 0x8, scoped, tag = 'scoped memory for tpu_custom_call.1']
    #allocation5 [shape = 'u8[196608]{0}', space=vmem, size = 0x30000, scoped, tag = 'input window, operand 1']
    #allocation6 [shape = 's32[2]{0}', space=sflag, size = 0x8, scoped, tag = 'scoped memory for tpu_custom_call.1']
    #allocation7 [shape = 'u8[131072]{0}', space=vmem, size = 0x20000, scoped, tag = 'input window, operand 2']
    #allocation8 [shape = 'u8[196608]{0}', space=vmem, size = 0x30000, scoped, tag = 'output window, operand 0']
    #allocation9 [shape = 'u8[65536]{0}', space=vmem, size = 0x10000, scoped, tag = 'output window, operand 2']
    #allocation10 [shape = 's32[2]{0}', space=sflag, size = 0x8, scoped, tag = 'scoped memory for tpu_custom_call.1']
    %11 = vsyncpa [#allocation3], 0
    %s12 = scalar_lea.sflag [#allocation3], 1
    %13 = vsyncpa %s12, 0
    %14 = vsyncpa [#allocation6], 0
    %s15 = scalar_lea.sflag [#allocation6], 1
    %16 = vsyncpa %s15, 0
    %17 = vsyncpa [#allocation4], 0
    %s18 = scalar_lea.sflag [#allocation4], 1
    %19 = vsyncpa %s18, 0
    %20 = vsyncpa [#allocation10], 0
    %s21 = scalar_lea.sflag [#allocation10], 1
    %22 = vsyncpa %s21, 0
    loop: start=0, step=1, limit=5
    $region2: #{tpu_custom_call.1} parent=1 // loop_pre_header
      _
    $region3: #{tpu_custom_call.1} parent=1 // loop_header
      %s24 = sphi 0, %s28
      %p25 = scmp.ge.s32.totalorder %s24, 5
      %s34 = sphi 0, %s36
      %s37 = sphi 0, %s34
      %s38 = sphi 0, %s37
      %s54 = sphi 0, %s38
      %s60 = sphi 0, %s62
      %s63 = sphi 0, %s60
      %s64 = sphi 0, %s63
      %s80 = sphi 0, %s64
      %s86 = sphi 0, %s88
      %s89 = sphi 0, %s86
      %s90 = sphi 0, %s89
      %s106 = sphi 0, %s90
      %s112 = sphi 0, %s114
      %s115 = sphi 0, %s112
      %s116 = sphi 0, %s115
      %s132 = sphi 0, %s116
      %s138 = sphi 0, %s140
      %s141 = sphi 0, %s138
      %s142 = sphi 0, %s141
      %s158 = sphi 0, %s142
      %s164 = sphi 0, %s166
      %s167 = sphi 0, %s164
      %s168 = sphi 0, %s167
      %s184 = sphi 0, %s168
    $region4: #{tpu_custom_call.1} parent=1 // loop_header_branch
      %27 = sbr.rel (%p25) target = $region8
    $region5: #{tpu_custom_call.1} parent=1 // loop_body
      %s29 = ssub.s32 %s24, 1
      %s30 = ssub.s32 %s24, 2
      %s31 = sadd.s32 %s24, 1
      %s32 = ssub.s32 %s24, %s31
      %p33 = scmp.eq.s32.totalorder %s32, 0
      %s35 = sadd.s32 %s34, 1
      %s36 = scalar_select %p33, %s34, %s35
      %p39 = pneg %p33
      %p40 = scmp.eq.s32.totalorder %s24, 2
      %p41 = por %p39, %p40
      %p42 = scmp.ne.s32.totalorder %s34, %s37
      %p43 = scmp.eq.s32.totalorder %s24, 0
      %p44 = por %p42, %p43
      %p45 = scmp.ne.s32.totalorder %s34, %s37
      %p46 = scmp.eq.s32.totalorder %s29, 2
      %p47 = por %p45, %p46
      %p48 = scmp.ne.s32.totalorder %s37, %s38
      %p49 = scmp.eq.s32.totalorder %s29, 0
      %p50 = por %p48, %p49
      %p51 = scmp.ne.s32.totalorder %s37, %s38
      %p52 = scmp.eq.s32.totalorder %s30, 2
      %p53 = por %p51, %p52
      %p55 = scmp.ne.s32.totalorder %s38, %s54
      %p56 = scmp.eq.s32.totalorder %s30, 0
      %p57 = por %p55, %p56
      %s58 = ssub.s32 %s24, %s31
      %p59 = scmp.eq.s32.totalorder %s58, 0
      %s61 = sadd.s32 %s60, 1
      %s62 = scalar_select %p59, %s60, %s61
      %p65 = pneg %p59
      %p66 = scmp.eq.s32.totalorder %s24, 2
      %p67 = por %p65, %p66
      %p68 = scmp.ne.s32.totalorder %s60, %s63
      %p69 = scmp.eq.s32.totalorder %s24, 0
      %p70 = por %p68, %p69
      %p71 = scmp.ne.s32.totalorder %s60, %s63
      %p72 = scmp.eq.s32.totalorder %s29, 2
      %p73 = por %p71, %p72
      %p74 = scmp.ne.s32.totalorder %s63, %s64
      %p75 = scmp.eq.s32.totalorder %s29, 0
      %p76 = por %p74, %p75
      %p77 = scmp.ne.s32.totalorder %s63, %s64
      %p78 = scmp.eq.s32.totalorder %s30, 2
      %p79 = por %p77, %p78
      %p81 = scmp.ne.s32.totalorder %s64, %s80
      %p82 = scmp.eq.s32.totalorder %s30, 0
      %p83 = por %p81, %p82
      %s84 = ssub.s32 %s24, %s31
      %p85 = scmp.eq.s32.totalorder %s84, 0
      %s87 = sadd.s32 %s86, 1
      %s88 = scalar_select %p85, %s86, %s87
      %p91 = pneg %p85
      %p92 = scmp.eq.s32.totalorder %s24, 2
      %p93 = por %p91, %p92
      %p94 = scmp.ne.s32.totalorder %s86, %s89
      %p95 = scmp.eq.s32.totalorder %s24, 0
      %p96 = por %p94, %p95
      %p97 = scmp.ne.s32.totalorder %s86, %s89
      %p98 = scmp.eq.s32.totalorder %s29, 2
      %p99 = por %p97, %p98
      %p100 = scmp.ne.s32.totalorder %s89, %s90
      %p101 = scmp.eq.s32.totalorder %s29, 0
      %p102 = por %p100, %p101
      %p103 = scmp.ne.s32.totalorder %s89, %s90
      %p104 = scmp.eq.s32.totalorder %s30, 2
      %p105 = por %p103, %p104
      %p107 = scmp.ne.s32.totalorder %s90, %s106
      %p108 = scmp.eq.s32.totalorder %s30, 0
      %p109 = por %p107, %p108
      %s110 = ssub.s32 %s24, %s31
      %p111 = scmp.eq.s32.totalorder %s110, 0
      %s113 = sadd.s32 %s112, 1
      %s114 = scalar_select %p111, %s112, %s113
      %p117 = pneg %p111
      %p118 = scmp.eq.s32.totalorder %s24, 2
      %p119 = por %p117, %p118
      %p120 = scmp.ne.s32.totalorder %s112, %s115
      %p121 = scmp.eq.s32.totalorder %s24, 0
      %p122 = por %p120, %p121
      %p123 = scmp.ne.s32.totalorder %s112, %s115
      %p124 = scmp.eq.s32.totalorder %s29, 2
      %p125 = por %p123, %p124
      %p126 = scmp.ne.s32.totalorder %s115, %s116
      %p127 = scmp.eq.s32.totalorder %s29, 0
      %p128 = por %p126, %p127
      %p129 = scmp.ne.s32.totalorder %s115, %s116
      %p130 = scmp.eq.s32.totalorder %s30, 2
      %p131 = por %p129, %p130
      %p133 = scmp.ne.s32.totalorder %s116, %s132
      %p134 = scmp.eq.s32.totalorder %s30, 0
      %p135 = por %p133, %p134
      %s136 = ssub.s32 %s24, %s31
      %p137 = scmp.eq.s32.totalorder %s136, 0
      %s139 = sadd.s32 %s138, 1
      %s140 = scalar_select %p137, %s138, %s139
      %p143 = pneg %p137
      %p144 = scmp.eq.s32.totalorder %s24, 2
      %p145 = por %p143, %p144
      %p146 = scmp.ne.s32.totalorder %s138, %s141
      %p147 = scmp.eq.s32.totalorder %s24, 0
      %p148 = por %p146, %p147
      %p149 = scmp.ne.s32.totalorder %s138, %s141
      %p150 = scmp.eq.s32.totalorder %s29, 2
      %p151 = por %p149, %p150
      %p152 = scmp.ne.s32.totalorder %s141, %s142
      %p153 = scmp.eq.s32.totalorder %s29, 0
      %p154 = por %p152, %p153
      %p155 = scmp.ne.s32.totalorder %s141, %s142
      %p156 = scmp.eq.s32.totalorder %s30, 2
      %p157 = por %p155, %p156
      %p159 = scmp.ne.s32.totalorder %s142, %s158
      %p160 = scmp.eq.s32.totalorder %s30, 0
      %p161 = por %p159, %p160
      %s162 = ssub.s32 %s24, %s31
      %p163 = scmp.eq.s32.totalorder %s162, 0
      %s165 = sadd.s32 %s164, 1
      %s166 = scalar_select %p163, %s164, %s165
      %p169 = pneg %p163
      %p170 = scmp.eq.s32.totalorder %s24, 2
      %p171 = por %p169, %p170
      %p172 = scmp.ne.s32.totalorder %s164, %s167
      %p173 = scmp.eq.s32.totalorder %s24, 0
      %p174 = por %p172, %p173
      %p175 = scmp.ne.s32.totalorder %s164, %s167
      %p176 = scmp.eq.s32.totalorder %s29, 2
      %p177 = por %p175, %p176
      %p178 = scmp.ne.s32.totalorder %s167, %s168
      %p179 = scmp.eq.s32.totalorder %s29, 0
      %p180 = por %p178, %p179
      %p181 = scmp.ne.s32.totalorder %s167, %s168
      %p182 = scmp.eq.s32.totalorder %s30, 2
      %p183 = por %p181, %p182
      %p185 = scmp.ne.s32.totalorder %s168, %s184
      %p186 = scmp.eq.s32.totalorder %s30, 0
      %p187 = por %p185, %p186
      %p188 = scmp.le.s32.totalorder 1, %s24
      %p189 = scmp.lt.s32.totalorder %s24, 4
      %p190 = pnand %p188, %p189
      %p191 = pneg %p190
      // Predicated region
      $region9: #{tpu_custom_call.1} parent=5 // pred_check
        _
      $region10: #{tpu_custom_call.1} parent=5 // pred_check_branch
        %193 = sbr.rel (%p190) target = $region12
      $region11: #{tpu_custom_call.1} parent=5 // pred_region
        %s194 = ssub.s32 %s24, 1
      $region12: #{tpu_custom_call.1} parent=5 // pred_fallthru
        _
      %p195 = scmp.lt.s32.totalorder %s24, 3
      // Predicated region
      $region13: #{tpu_custom_call.1} parent=5 // pred_check
        %p196 = pneg %p195
      $region14: #{tpu_custom_call.1} parent=5 // pred_check_branch
        %198 = sbr.rel (%p196) target = $region16
      $region15: #{tpu_custom_call.1} parent=5 // pred_region
        // Predicated region
        $region17: #{tpu_custom_call.1} parent=15 // pred_check
          %p199 = pneg %p44
        $region18: #{tpu_custom_call.1} parent=15 // pred_check_branch
          %201 = sbr.rel (%p199) target = $region20
        $region19: #{tpu_custom_call.1} parent=15 // pred_region
          %s202 = sand.u32 %s34, 1
          %s203 = scalar_lea.sflag [#allocation3], %s202
          %s204 = sand.u32 %s34, 1
          %s205 = smul.addr %s204, 192
          %s206 = scalar_lea.vmem [#allocation2], %s205
          %s207 = smul.u32 16, %s24
          %209 = vsyncadd %s203, 0
          %s210 = smul.addr %s207, 3
          %s211 = smul.addr %s210, 4
          %s212 = scalar_lea.hbm %s0, %s211
          %s213 = sshll.u32 %s212, 4
          %s214 = int_to_ptr.hbm [resolvable:$true] %s213
          %s215 = sshll.u32 %s206, 4
          %s216 = int_to_ptr.vmem [resolvable:$true] %s215
          %221 = dma.hbm_to_vmem [thread:$0]  %s214, 3072, %s216, %s203, 192, 192, 12
        $region20: #{tpu_custom_call.1} parent=15 // pred_fallthru
          _
        // Predicated region
        $region21: #{tpu_custom_call.1} parent=15 // pred_check
          %p222 = pneg %p70
        $region22: #{tpu_custom_call.1} parent=15 // pred_check_branch
          %224 = sbr.rel (%p222) target = $region24
        $region23: #{tpu_custom_call.1} parent=15 // pred_region
          %s225 = sand.u32 %s24, 1
          %s226 = scalar_lea.sflag [#allocation6], %s225
          %s227 = sand.u32 %s60, 1
          %s228 = smul.addr %s227, 192
          %s229 = scalar_lea.vmem [#allocation5], %s228
          %231 = vsyncadd %s226, 0
          %s232 = smul.addr %s24, 4
          %s233 = scalar_lea.hbm %s1, %s232
          %s234 = sshll.u32 %s233, 4
          %s235 = int_to_ptr.hbm [resolvable:$true] %s234
          %s236 = sshll.u32 %s229, 4
          %s237 = int_to_ptr.vmem [resolvable:$true] %s236
          %242 = dma.hbm_to_vmem [thread:$0]  %s235, 3072, %s237, %s226, 192, 64, 4
        $region24: #{tpu_custom_call.1} parent=15 // pred_fallthru
          _
        // Predicated region
        $region25: #{tpu_custom_call.1} parent=15 // pred_check
          %p243 = pneg %p96
        $region26: #{tpu_custom_call.1} parent=15 // pred_check_branch
          %245 = sbr.rel (%p243) target = $region28
        $region27: #{tpu_custom_call.1} parent=15 // pred_region
          %s246 = sand.u32 %s24, 1
          %s247 = scalar_lea.sflag [#allocation6], %s246
          %s248 = sand.u32 %s86, 1
          %s249 = smul.addr %s248, 128
          %s250 = scalar_lea.vmem [#allocation7], %s249
          %s251 = smul.u32 16, %s24
          %253 = vsyncadd %s247, 0
          %s254 = smul.addr %s251, 8
          %s255 = scalar_lea.hbm %s2, %s254
          %s256 = sshll.u32 %s255, 4
          %s257 = int_to_ptr.hbm [resolvable:$true] %s256
          %s258 = sshll.u32 %s250, 4
          %s259 = int_to_ptr.vmem [resolvable:$true] %s258
          %264 = dma.hbm_to_vmem [thread:$0]  %s257, 2048, %s259, %s247, 128, 128, 8
        $region28: #{tpu_custom_call.1} parent=15 // pred_fallthru
          _
      $region16: #{tpu_custom_call.1} parent=5 // pred_fallthru
        _
      %p265 = scmp.le.s32.totalorder 1, %s24
      %p266 = scmp.lt.s32.totalorder %s24, 4
      %p267 = pnand %p265, %p266
      %p268 = pneg %p267
      // Predicated region
      $region29: #{tpu_custom_call.1} parent=5 // pred_check
        _
      $region30: #{tpu_custom_call.1} parent=5 // pred_check_branch
        %270 = sbr.rel (%p267) target = $region32
      $region31: #{tpu_custom_call.1} parent=5 // pred_region
        %s271 = ssub.s32 %s24, 1
        %s272 = sand.u32 %s37, 1
        %s273 = scalar_lea.sflag [#allocation3], %s272
        %s274 = sand.u32 %s37, 1
        %s275 = smul.addr %s274, 192
        %s276 = scalar_lea.vmem [#allocation2], %s275
        // Predicated region
        $region33: #{tpu_custom_call.1} parent=31 // pred_check
          %p277 = pneg %p50
        $region34: #{tpu_custom_call.1} parent=31 // pred_check_branch
          %279 = sbr.rel (%p277) target = $region36
        $region35: #{tpu_custom_call.1} parent=31 // pred_region
          %281 = dma.done %s273, 3072
        $region36: #{tpu_custom_call.1} parent=31 // pred_fallthru
          _
        %s282 = sand.u32 %s29, 1
        %s283 = scalar_lea.sflag [#allocation6], %s282
        %s284 = sand.u32 %s63, 1
        %s285 = smul.addr %s284, 192
        %s286 = scalar_lea.vmem [#allocation5], %s285
        // Predicated region
        $region37: #{tpu_custom_call.1} parent=31 // pred_check
          %p287 = pneg %p76
        $region38: #{tpu_custom_call.1} parent=31 // pred_check_branch
          %289 = sbr.rel (%p287) target = $region40
        $region39: #{tpu_custom_call.1} parent=31 // pred_region
          %291 = dma.done %s283, 3072
        $region40: #{tpu_custom_call.1} parent=31 // pred_fallthru
          _
        %s292 = sand.u32 %s29, 1
        %s293 = scalar_lea.sflag [#allocation6], %s292
        %s294 = sand.u32 %s89, 1
        %s295 = smul.addr %s294, 128
        %s296 = scalar_lea.vmem [#allocation7], %s295
        // Predicated region
        $region41: #{tpu_custom_call.1} parent=31 // pred_check
          %p297 = pneg %p102
        $region42: #{tpu_custom_call.1} parent=31 // pred_check_branch
          %299 = sbr.rel (%p297) target = $region44
        $region43: #{tpu_custom_call.1} parent=31 // pred_region
          %301 = dma.done %s293, 2048
        $region44: #{tpu_custom_call.1} parent=31 // pred_fallthru
          _
        %s302 = sand.u32 %s37, 1
        %s303 = scalar_lea.sflag [#allocation3], %s302
        %s304 = sand.u32 %s37, 1
        %s305 = smul.addr %s304, 192
        %s306 = scalar_lea.vmem [#allocation2], %s305
        %p307 = pneg %p50
        %p308 = pneg %p47
        %s309 = sand.u32 %s29, 1
        %s310 = scalar_lea.sflag [#allocation6], %s309
        %s311 = sand.u32 %s63, 1
        %s312 = smul.addr %s311, 192
        %s313 = scalar_lea.vmem [#allocation5], %s312
        %p314 = pneg %p76
        %p315 = pneg %p73
        %s316 = sand.u32 %s29, 1
        %s317 = scalar_lea.sflag [#allocation6], %s316
        %s318 = sand.u32 %s89, 1
        %s319 = smul.addr %s318, 128
        %s320 = scalar_lea.vmem [#allocation7], %s319
        %p321 = pneg %p102
        %p322 = pneg %p99
        %p323 = pneg %p128
        %p324 = pneg %p125
        %s325 = sand.u32 %s115, 1
        %s326 = scalar_lea.sflag [#allocation4], %s325
        %s327 = sand.u32 %s115, 1
        %s328 = smul.addr %s327, 192
        %s329 = scalar_lea.vmem [#allocation8], %s328
        %p330 = pneg %p154
        %p331 = pneg %p151
        %s332 = smul.u32 16, %s29
        %p333 = scmp.lt.s32.totalorder %s332, 47
        %s334 = scalar_select %p333, %s332, 47
        %s335 = smul.addr %s334, 8
        %s336 = scalar_lea.vmem %s4, %s335
        %p337 = pneg %p180
        %p338 = pneg %p177
        %s339 = sand.u32 %s167, 1
        %s340 = scalar_lea.sflag [#allocation10], %s339
        %s341 = sand.u32 %s167, 1
        %s342 = smul.addr %s341, 64
        %s343 = scalar_lea.vmem [#allocation9], %s342
        %s344 = smul.u32 16, %s29
        %s345 = smul.u32 16, %s29
        %s346 = smul.u32 16, %s29
        %s347 = smul.u32 16, %s29
        %p348 = scmp.lt.s32.totalorder %s347, 47
        %s349 = scalar_select %p348, %s347, 47
        %s350 = smul.addr %s349, 8
        %s351 = scalar_lea.vmem %s4, %s350
        %s352 = smul.u32 16, %s29
        %s353 = smul.u32 16, %s29
        %s354 = smul.u32 %s29, 128
        %v355 = vlaneseq
        %v356 = vshrl.u32 %v355, 7
        %v357 = vadd.s32 %v356, 8
        %v358 = vadd.s32 %v356, 16
        %v359 = vadd.s32 %v356, 24
        %v360 = vadd.s32 %v356, 32
        %v361 = vadd.s32 %v356, 40
        %v362 = vadd.s32 %v356, 48
        %v363 = vadd.s32 %v356, 56
        %v364 = vadd.s32 %v356, 64
        %v365 = vadd.s32 %v356, 72
        %v366 = vadd.s32 %v356, 80
        %v367 = vadd.s32 %v356, 88
        %v368 = vadd.s32 %v356, 96
        %v369 = vadd.s32 %v356, 104
        %v370 = vadd.s32 %v356, 112
        %v371 = vadd.s32 %v356, 120
        %v372 = vstv %s354
        %v373 = vadd.s32 %v372, %v356
        %v374 = vadd.s32 %v372, %v357
        %v375 = vadd.s32 %v372, %v358
        %v376 = vadd.s32 %v372, %v359
        %v377 = vadd.s32 %v372, %v360
        %v378 = vadd.s32 %v372, %v361
        %v379 = vadd.s32 %v372, %v362
        %v380 = vadd.s32 %v372, %v363
        %v381 = vadd.s32 %v372, %v364
        %v382 = vadd.s32 %v372, %v365
        %v383 = vadd.s32 %v372, %v366
        %v384 = vadd.s32 %v372, %v367
        %v385 = vadd.s32 %v372, %v368
        %v386 = vadd.s32 %v372, %v369
        %v387 = vadd.s32 %v372, %v370
        %v388 = vadd.s32 %v372, %v371
        %v389 = vlaneseq
        %v390 = vand.u32 %v389, 127
        %v391 = vadd.s32 %v390, 128
        %v392 = vadd.s32 %v390, 256
        %v393 = vld [vmem:[%s276] sm:$0xff]
        %v394 = vld [vmem:[%s276 + $0x8] sm:$0xf]
        %v395 = vld [vmem:[%s276 + $0xc] sm:$0xff]
        %v396 = vld [vmem:[%s276 + $0x14] sm:$0xf]
        %v397 = vld [vmem:[%s276 + $0x18] sm:$0xff]
        %v398 = vld [vmem:[%s276 + $0x20] sm:$0xf]
        %v399 = vld [vmem:[%s276 + $0x24] sm:$0xff]
        %v400 = vld [vmem:[%s276 + $0x2c] sm:$0xf]
        %v401 = vld [vmem:[%s276 + $0x30] sm:$0xff]
        %v402 = vld [vmem:[%s276 + $0x38] sm:$0xf]
        %v403 = vld [vmem:[%s276 + $0x3c] sm:$0xff]
        %v404 = vld [vmem:[%s276 + $0x44] sm:$0xf]
        %v405 = vld [vmem:[%s276 + $0x48] sm:$0xff]
        %v406 = vld [vmem:[%s276 + $0x50] sm:$0xf]
        %v407 = vld [vmem:[%s276 + $0x54] sm:$0xff]
        %v408 = vld [vmem:[%s276 + $0x5c] sm:$0xf]
        %v409 = vld [vmem:[%s276 + $0x60] sm:$0xff]
        %v410 = vld [vmem:[%s276 + $0x68] sm:$0xf]
        %v411 = vld [vmem:[%s276 + $0x6c] sm:$0xff]
        %v412 = vld [vmem:[%s276 + $0x74] sm:$0xf]
        %v413 = vld [vmem:[%s276 + $0x78] sm:$0xff]
        %v414 = vld [vmem:[%s276 + $0x80] sm:$0xf]
        %v415 = vld [vmem:[%s276 + $0x84] sm:$0xff]
        %v416 = vld [vmem:[%s276 + $0x8c] sm:$0xf]
        %v417 = vld [vmem:[%s276 + $0x90] sm:$0xff]
        %v418 = vld [vmem:[%s276 + $0x98] sm:$0xf]
        %v419 = vld [vmem:[%s276 + $0x9c] sm:$0xff]
        %v420 = vld [vmem:[%s276 + $0xa4] sm:$0xf]
        %v421 = vld [vmem:[%s276 + $0xa8] sm:$0xff]
        %v422 = vld [vmem:[%s276 + $0xb0] sm:$0xf]
        %v423 = vld [vmem:[%s276 + $0xb4] sm:$0xff]
        %v424 = vld [vmem:[%s276 + $0xbc] sm:$0xf]
        %v425 = vunpack.c.l.bf16 %v393
        %v426 = vunpack.c.h.bf16 %v393
        %v427 = vunpack.c.l.bf16 %v394
        %v428 = vunpack.c.l.bf16 %v395
        %v429 = vunpack.c.h.bf16 %v395
        %v430 = vunpack.c.l.bf16 %v396
        %v431 = vunpack.c.l.bf16 %v397
        %v432 = vunpack.c.h.bf16 %v397
        %v433 = vunpack.c.l.bf16 %v398
        %v434 = vunpack.c.l.bf16 %v399
        %v435 = vunpack.c.h.bf16 %v399
        %v436 = vunpack.c.l.bf16 %v400
        %v437 = vunpack.c.l.bf16 %v401
        %v438 = vunpack.c.h.bf16 %v401
        %v439 = vunpack.c.l.bf16 %v402
        %v440 = vunpack.c.l.bf16 %v403
        %v441 = vunpack.c.h.bf16 %v403
        %v442 = vunpack.c.l.bf16 %v404
        %v443 = vunpack.c.l.bf16 %v405
        %v444 = vunpack.c.h.bf16 %v405
        %v445 = vunpack.c.l.bf16 %v406
        %v446 = vunpack.c.l.bf16 %v407
        %v447 = vunpack.c.h.bf16 %v407
        %v448 = vunpack.c.l.bf16 %v408
        %v449 = vunpack.c.l.bf16 %v409
        %v450 = vunpack.c.h.bf16 %v409
        %v451 = vunpack.c.l.bf16 %v410
        %v452 = vunpack.c.l.bf16 %v411
        %v453 = vunpack.c.h.bf16 %v411
        %v454 = vunpack.c.l.bf16 %v412
        %v455 = vunpack.c.l.bf16 %v413
        %v456 = vunpack.c.h.bf16 %v413
        %v457 = vunpack.c.l.bf16 %v414
        %v458 = vunpack.c.l.bf16 %v415
        %v459 = vunpack.c.h.bf16 %v415
        %v460 = vunpack.c.l.bf16 %v416
        %v461 = vunpack.c.l.bf16 %v417
        %v462 = vunpack.c.h.bf16 %v417
        %v463 = vunpack.c.l.bf16 %v418
        %v464 = vunpack.c.l.bf16 %v419
        %v465 = vunpack.c.h.bf16 %v419
        %v466 = vunpack.c.l.bf16 %v420
        %v467 = vunpack.c.l.bf16 %v421
        %v468 = vunpack.c.h.bf16 %v421
        %v469 = vunpack.c.l.bf16 %v422
        %v470 = vunpack.c.l.bf16 %v423
        %v471 = vunpack.c.h.bf16 %v423
        %v472 = vunpack.c.l.bf16 %v424
        %v473 = vld [vmem:[%s286] sm:$0xf]
        %v474 = vld [vmem:[%s286 + $0x4] sm:$0xf]
        %v475 = vld [vmem:[%s286 + $0x8] sm:$0xf]
        %v476 = vld [vmem:[%s286 + $0xc] sm:$0xf]
        %v477 = vld [vmem:[%s286 + $0x10] sm:$0xf]
        %v478 = vld [vmem:[%s286 + $0x14] sm:$0xf]
        %v479 = vld [vmem:[%s286 + $0x18] sm:$0xf]
        %v480 = vld [vmem:[%s286 + $0x1c] sm:$0xf]
        %v481 = vld [vmem:[%s286 + $0x20] sm:$0xf]
        %v482 = vld [vmem:[%s286 + $0x24] sm:$0xf]
        %v483 = vld [vmem:[%s286 + $0x28] sm:$0xf]
        %v484 = vld [vmem:[%s286 + $0x2c] sm:$0xf]
        %v485 = vld [vmem:[%s286 + $0x30] sm:$0xf]
        %v486 = vld [vmem:[%s286 + $0x34] sm:$0xf]
        %v487 = vld [vmem:[%s286 + $0x38] sm:$0xf]
        %v488 = vld [vmem:[%s286 + $0x3c] sm:$0xf]
        %v489 = vld [vmem:[%s286 + $0x40] sm:$0xf]
        %v490 = vld [vmem:[%s286 + $0x44] sm:$0xf]
        %v491 = vld [vmem:[%s286 + $0x48] sm:$0xf]
        %v492 = vld [vmem:[%s286 + $0x4c] sm:$0xf]
        %v493 = vld [vmem:[%s286 + $0x50] sm:$0xf]
        %v494 = vld [vmem:[%s286 + $0x54] sm:$0xf]
        %v495 = vld [vmem:[%s286 + $0x58] sm:$0xf]
        %v496 = vld [vmem:[%s286 + $0x5c] sm:$0xf]
        %v497 = vld [vmem:[%s286 + $0x60] sm:$0xf]
        %v498 = vld [vmem:[%s286 + $0x64] sm:$0xf]
        %v499 = vld [vmem:[%s286 + $0x68] sm:$0xf]
        %v500 = vld [vmem:[%s286 + $0x6c] sm:$0xf]
        %v501 = vld [vmem:[%s286 + $0x70] sm:$0xf]
        %v502 = vld [vmem:[%s286 + $0x74] sm:$0xf]
        %v503 = vld [vmem:[%s286 + $0x78] sm:$0xf]
        %v504 = vld [vmem:[%s286 + $0x7c] sm:$0xf]
        %v505 = vld [vmem:[%s286 + $0x80] sm:$0xf]
        %v506 = vld [vmem:[%s286 + $0x84] sm:$0xf]
        %v507 = vld [vmem:[%s286 + $0x88] sm:$0xf]
        %v508 = vld [vmem:[%s286 + $0x8c] sm:$0xf]
        %v509 = vld [vmem:[%s286 + $0x90] sm:$0xf]
        %v510 = vld [vmem:[%s286 + $0x94] sm:$0xf]
        %v511 = vld [vmem:[%s286 + $0x98] sm:$0xf]
        %v512 = vld [vmem:[%s286 + $0x9c] sm:$0xf]
        %v513 = vld [vmem:[%s286 + $0xa0] sm:$0xf]
        %v514 = vld [vmem:[%s286 + $0xa4] sm:$0xf]
        %v515 = vld [vmem:[%s286 + $0xa8] sm:$0xf]
        %v516 = vld [vmem:[%s286 + $0xac] sm:$0xf]
        %v517 = vld [vmem:[%s286 + $0xb0] sm:$0xf]
        %v518 = vld [vmem:[%s286 + $0xb4] sm:$0xf]
        %v519 = vld [vmem:[%s286 + $0xb8] sm:$0xf]
        %v520 = vld [vmem:[%s286 + $0xbc] sm:$0xf]
        %v521 = vunpack.c.l.bf16 %v473
        %v522 = vunpack.c.l.bf16 %v474
        %v523 = vunpack.c.l.bf16 %v475
        %v524 = vunpack.c.l.bf16 %v476
        %v525 = vunpack.c.l.bf16 %v477
        %v526 = vunpack.c.l.bf16 %v478
        %v527 = vunpack.c.l.bf16 %v479
        %v528 = vunpack.c.l.bf16 %v480
        %v529 = vunpack.c.l.bf16 %v481
        %v530 = vunpack.c.l.bf16 %v482
        %v531 = vunpack.c.l.bf16 %v483
        %v532 = vunpack.c.l.bf16 %v484
        %v533 = vunpack.c.l.bf16 %v485
        %v534 = vunpack.c.l.bf16 %v486
        %v535 = vunpack.c.l.bf16 %v487
        %v536 = vunpack.c.l.bf16 %v488
        %v537 = vunpack.c.l.bf16 %v489
        %v538 = vunpack.c.l.bf16 %v490
        %v539 = vunpack.c.l.bf16 %v491
        %v540 = vunpack.c.l.bf16 %v492
        %v541 = vunpack.c.l.bf16 %v493
        %v542 = vunpack.c.l.bf16 %v494
        %v543 = vunpack.c.l.bf16 %v495
        %v544 = vunpack.c.l.bf16 %v496
        %v545 = vunpack.c.l.bf16 %v497
        %v546 = vunpack.c.l.bf16 %v498
        %v547 = vunpack.c.l.bf16 %v499
        %v548 = vunpack.c.l.bf16 %v500
        %v549 = vunpack.c.l.bf16 %v501
        %v550 = vunpack.c.l.bf16 %v502
        %v551 = vunpack.c.l.bf16 %v503
        %v552 = vunpack.c.l.bf16 %v504
        %v553 = vunpack.c.l.bf16 %v505
        %v554 = vunpack.c.l.bf16 %v506
        %v555 = vunpack.c.l.bf16 %v507
        %v556 = vunpack.c.l.bf16 %v508
        %v557 = vunpack.c.l.bf16 %v509
        %v558 = vunpack.c.l.bf16 %v510
        %v559 = vunpack.c.l.bf16 %v511
        %v560 = vunpack.c.l.bf16 %v512
        %v561 = vunpack.c.l.bf16 %v513
        %v562 = vunpack.c.l.bf16 %v514
        %v563 = vunpack.c.l.bf16 %v515
        %v564 = vunpack.c.l.bf16 %v516
        %v565 = vunpack.c.l.bf16 %v517
        %v566 = vunpack.c.l.bf16 %v518
        %v567 = vunpack.c.l.bf16 %v519
        %v568 = vunpack.c.l.bf16 %v520
        %569 = vxpose.xlu0.b32.start [1/16] %v521, 128
        %570 = vxpose.xlu0.b32.cont [2/16] %v522, 128
        %571 = vxpose.xlu0.b32.cont [3/16] %v523, 128
        %572 = vxpose.xlu0.b32.cont [4/16] %v524, 128
        %573 = vxpose.xlu0.b32.cont [5/16] %v525, 128
        %574 = vxpose.xlu0.b32.cont [6/16] %v526, 128
        %575 = vxpose.xlu0.b32.cont [7/16] %v527, 128
        %576 = vxpose.xlu0.b32.cont [8/16] %v528, 128
        %577 = vxpose.xlu0.b32.cont [9/16] %v529, 128
        %578 = vxpose.xlu0.b32.cont [10/16] %v530, 128
        %579 = vxpose.xlu0.b32.cont [11/16] %v531, 128
        %580 = vxpose.xlu0.b32.cont [12/16] %v532, 128
        %581 = vxpose.xlu0.b32.cont [13/16] %v533, 128
        %582 = vxpose.xlu0.b32.cont [14/16] %v534, 128
        %583 = vxpose.xlu0.b32.cont [15/16] %v535, 128
        %584 = vxpose.xlu0.b32.end [16/16] %v536, 128
        %v585 = vpop.trf.xlu0
        %v586 = vpop.trf.xlu0
        %v587 = vpop.trf.xlu0
        %v588 = vpop.trf.xlu0
        %v589 = vpop.trf.xlu0
        %v590 = vpop.trf.xlu0
        %v591 = vpop.trf.xlu0
        %v592 = vpop.trf.xlu0
        %v593 = vpop.trf.xlu0
        %v594 = vpop.trf.xlu0
        %v595 = vpop.trf.xlu0
        %v596 = vpop.trf.xlu0
        %v597 = vpop.trf.xlu0
        %v598 = vpop.trf.xlu0
        %v599 = vpop.trf.xlu0
        %v600 = vpop.trf.xlu0
        %601 = vxpose.xlu0.b32.start [1/16] %v537, 128
        %602 = vxpose.xlu0.b32.cont [2/16] %v538, 128
        %603 = vxpose.xlu0.b32.cont [3/16] %v539, 128
        %604 = vxpose.xlu0.b32.cont [4/16] %v540, 128
        %605 = vxpose.xlu0.b32.cont [5/16] %v541, 128
        %606 = vxpose.xlu0.b32.cont [6/16] %v542, 128
        %607 = vxpose.xlu0.b32.cont [7/16] %v543, 128
        %608 = vxpose.xlu0.b32.cont [8/16] %v544, 128
        %609 = vxpose.xlu0.b32.cont [9/16] %v545, 128
        %610 = vxpose.xlu0.b32.cont [10/16] %v546, 128
        %611 = vxpose.xlu0.b32.cont [11/16] %v547, 128
        %612 = vxpose.xlu0.b32.cont [12/16] %v548, 128
        %613 = vxpose.xlu0.b32.cont [13/16] %v549, 128
        %614 = vxpose.xlu0.b32.cont [14/16] %v550, 128
        %615 = vxpose.xlu0.b32.cont [15/16] %v551, 128
        %616 = vxpose.xlu0.b32.end [16/16] %v552, 128
        %v617 = vpop.trf.xlu0
        %v618 = vpop.trf.xlu0
        %v619 = vpop.trf.xlu0
        %v620 = vpop.trf.xlu0
        %v621 = vpop.trf.xlu0
        %v622 = vpop.trf.xlu0
        %v623 = vpop.trf.xlu0
        %v624 = vpop.trf.xlu0
        %v625 = vpop.trf.xlu0
        %v626 = vpop.trf.xlu0
        %v627 = vpop.trf.xlu0
        %v628 = vpop.trf.xlu0
        %v629 = vpop.trf.xlu0
        %v630 = vpop.trf.xlu0
        %v631 = vpop.trf.xlu0
        %v632 = vpop.trf.xlu0
        %633 = vxpose.xlu0.b32.start [1/16] %v553, 128
        %634 = vxpose.xlu0.b32.cont [2/16] %v554, 128
        %635 = vxpose.xlu0.b32.cont [3/16] %v555, 128
        %636 = vxpose.xlu0.b32.cont [4/16] %v556, 128
        %637 = vxpose.xlu0.b32.cont [5/16] %v557, 128
        %638 = vxpose.xlu0.b32.cont [6/16] %v558, 128
        %639 = vxpose.xlu0.b32.cont [7/16] %v559, 128
        %640 = vxpose.xlu0.b32.cont [8/16] %v560, 128
        %641 = vxpose.xlu0.b32.cont [9/16] %v561, 128
        %642 = vxpose.xlu0.b32.cont [10/16] %v562, 128
        %643 = vxpose.xlu0.b32.cont [11/16] %v563, 128
        %644 = vxpose.xlu0.b32.cont [12/16] %v564, 128
        %645 = vxpose.xlu0.b32.cont [13/16] %v565, 128
        %646 = vxpose.xlu0.b32.cont [14/16] %v566, 128
        %647 = vxpose.xlu0.b32.cont [15/16] %v567, 128
        %648 = vxpose.xlu0.b32.end [16/16] %v568, 128
        %v649 = vpop.trf.xlu0
        %v650 = vpop.trf.xlu0
        %v651 = vpop.trf.xlu0
        %v652 = vpop.trf.xlu0
        %v653 = vpop.trf.xlu0
        %v654 = vpop.trf.xlu0
        %v655 = vpop.trf.xlu0
        %v656 = vpop.trf.xlu0
        %v657 = vpop.trf.xlu0
        %v658 = vpop.trf.xlu0
        %v659 = vpop.trf.xlu0
        %v660 = vpop.trf.xlu0
        %v661 = vpop.trf.xlu0
        %v662 = vpop.trf.xlu0
        %v663 = vpop.trf.xlu0
        %v664 = vpop.trf.xlu0
        %vm665 = vcmp.gt.s32.totalorder %v390, %v373
        %vm666 = vcmp.gt.s32.totalorder %v391, %v373
        %vm667 = vcmp.gt.s32.totalorder %v392, %v373
        %vm668 = vcmp.gt.s32.totalorder %v390, %v374
        %vm669 = vcmp.gt.s32.totalorder %v391, %v374
        %vm670 = vcmp.gt.s32.totalorder %v392, %v374
        %vm671 = vcmp.gt.s32.totalorder %v390, %v375
        %vm672 = vcmp.gt.s32.totalorder %v391, %v375
        %vm673 = vcmp.gt.s32.totalorder %v392, %v375
        %vm674 = vcmp.gt.s32.totalorder %v390, %v376
        %vm675 = vcmp.gt.s32.totalorder %v391, %v376
        %vm676 = vcmp.gt.s32.totalorder %v392, %v376
        %vm677 = vcmp.gt.s32.totalorder %v390, %v377
        %vm678 = vcmp.gt.s32.totalorder %v391, %v377
        %vm679 = vcmp.gt.s32.totalorder %v392, %v377
        %vm680 = vcmp.gt.s32.totalorder %v390, %v378
        %vm681 = vcmp.gt.s32.totalorder %v391, %v378
        %vm682 = vcmp.gt.s32.totalorder %v392, %v378
        %vm683 = vcmp.gt.s32.totalorder %v390, %v379
        %vm684 = vcmp.gt.s32.totalorder %v391, %v379
        %vm685 = vcmp.gt.s32.totalorder %v392, %v379
        %vm686 = vcmp.gt.s32.totalorder %v390, %v380
        %vm687 = vcmp.gt.s32.totalorder %v391, %v380
        %vm688 = vcmp.gt.s32.totalorder %v392, %v380
        %vm689 = vcmp.gt.s32.totalorder %v390, %v381
        %vm690 = vcmp.gt.s32.totalorder %v391, %v381
        %vm691 = vcmp.gt.s32.totalorder %v392, %v381
        %vm692 = vcmp.gt.s32.totalorder %v390, %v382
        %vm693 = vcmp.gt.s32.totalorder %v391, %v382
        %vm694 = vcmp.gt.s32.totalorder %v392, %v382
        %vm695 = vcmp.gt.s32.totalorder %v390, %v383
        %vm696 = vcmp.gt.s32.totalorder %v391, %v383
        %vm697 = vcmp.gt.s32.totalorder %v392, %v383
        %vm698 = vcmp.gt.s32.totalorder %v390, %v384
        %vm699 = vcmp.gt.s32.totalorder %v391, %v384
        %vm700 = vcmp.gt.s32.totalorder %v392, %v384
        %vm701 = vcmp.gt.s32.totalorder %v390, %v385
        %vm702 = vcmp.gt.s32.totalorder %v391, %v385
        %vm703 = vcmp.gt.s32.totalorder %v392, %v385
        %vm704 = vcmp.gt.s32.totalorder %v390, %v386
        %vm705 = vcmp.gt.s32.totalorder %v391, %v386
        %vm706 = vcmp.gt.s32.totalorder %v392, %v386
        %vm707 = vcmp.gt.s32.totalorder %v390, %v387
        %vm708 = vcmp.gt.s32.totalorder %v391, %v387
        %vm709 = vcmp.gt.s32.totalorder %v392, %v387
        %vm710 = vcmp.gt.s32.totalorder %v390, %v388
        %vm711 = vcmp.gt.s32.totalorder %v391, %v388
        %vm712 = vcmp.gt.s32.totalorder %v392, %v388
        %vm713 = vcmp.lt.s32.totalorder %v390, %v373
        %vm714 = vcmp.lt.s32.totalorder %v391, %v373
        %vm715 = vcmp.lt.s32.totalorder %v392, %v373
        %vm716 = vcmp.lt.s32.totalorder %v390, %v374
        %vm717 = vcmp.lt.s32.totalorder %v391, %v374
        %vm718 = vcmp.lt.s32.totalorder %v392, %v374
        %vm719 = vcmp.lt.s32.totalorder %v390, %v375
        %vm720 = vcmp.lt.s32.totalorder %v391, %v375
        %vm721 = vcmp.lt.s32.totalorder %v392, %v375
        %vm722 = vcmp.lt.s32.totalorder %v390, %v376
        %vm723 = vcmp.lt.s32.totalorder %v391, %v376
        %vm724 = vcmp.lt.s32.totalorder %v392, %v376
        %vm725 = vcmp.lt.s32.totalorder %v390, %v377
        %vm726 = vcmp.lt.s32.totalorder %v391, %v377
        %vm727 = vcmp.lt.s32.totalorder %v392, %v377
        %vm728 = vcmp.lt.s32.totalorder %v390, %v378
        %vm729 = vcmp.lt.s32.totalorder %v391, %v378
        %vm730 = vcmp.lt.s32.totalorder %v392, %v378
        %vm731 = vcmp.lt.s32.totalorder %v390, %v379
        %vm732 = vcmp.lt.s32.totalorder %v391, %v379
        %vm733 = vcmp.lt.s32.totalorder %v392, %v379
        %vm734 = vcmp.lt.s32.totalorder %v390, %v380
        %vm735 = vcmp.lt.s32.totalorder %v391, %v380
        %vm736 = vcmp.lt.s32.totalorder %v392, %v380
        %vm737 = vcmp.lt.s32.totalorder %v390, %v381
        %vm738 = vcmp.lt.s32.totalorder %v391, %v381
        %vm739 = vcmp.lt.s32.totalorder %v392, %v381
        %vm740 = vcmp.lt.s32.totalorder %v390, %v382
        %vm741 = vcmp.lt.s32.totalorder %v391, %v382
        %vm742 = vcmp.lt.s32.totalorder %v392, %v382
        %vm743 = vcmp.lt.s32.totalorder %v390, %v383
        %vm744 = vcmp.lt.s32.totalorder %v391, %v383
        %vm745 = vcmp.lt.s32.totalorder %v392, %v383
        %vm746 = vcmp.lt.s32.totalorder %v390, %v384
        %vm747 = vcmp.lt.s32.totalorder %v391, %v384
        %vm748 = vcmp.lt.s32.totalorder %v392, %v384
        %vm749 = vcmp.lt.s32.totalorder %v390, %v385
        %vm750 = vcmp.lt.s32.totalorder %v391, %v385
        %vm751 = vcmp.lt.s32.totalorder %v392, %v385
        %vm752 = vcmp.lt.s32.totalorder %v390, %v386
        %vm753 = vcmp.lt.s32.totalorder %v391, %v386
        %vm754 = vcmp.lt.s32.totalorder %v392, %v386
        %vm755 = vcmp.lt.s32.totalorder %v390, %v387
        %vm756 = vcmp.lt.s32.totalorder %v391, %v387
        %vm757 = vcmp.lt.s32.totalorder %v392, %v387
        %vm758 = vcmp.lt.s32.totalorder %v390, %v388
        %vm759 = vcmp.lt.s32.totalorder %v391, %v388
        %vm760 = vcmp.lt.s32.totalorder %v392, %v388
        %v761 = vsel %vm713, %v585, 1.0
        %v762 = vsel %vm714, %v617, 1.0
        %v763 = vsel %vm715, %v649, 1.0
        %v764 = vsel %vm716, %v586, 1.0
        %v765 = vsel %vm717, %v618, 1.0
        %v766 = vsel %vm718, %v650, 1.0
        %v767 = vsel %vm719, %v587, 1.0
        %v768 = vsel %vm720, %v619, 1.0
        %v769 = vsel %vm721, %v651, 1.0
        %v770 = vsel %vm722, %v588, 1.0
        %v771 = vsel %vm723, %v620, 1.0
        %v772 = vsel %vm724, %v652, 1.0
        %v773 = vsel %vm725, %v589, 1.0
        %v774 = vsel %vm726, %v621, 1.0
        %v775 = vsel %vm727, %v653, 1.0
        %v776 = vsel %vm728, %v590, 1.0
        %v777 = vsel %vm729, %v622, 1.0
        %v778 = vsel %vm730, %v654, 1.0
        %v779 = vsel %vm731, %v591, 1.0
        %v780 = vsel %vm732, %v623, 1.0
        %v781 = vsel %vm733, %v655, 1.0
        %v782 = vsel %vm734, %v592, 1.0
        %v783 = vsel %vm735, %v624, 1.0
        %v784 = vsel %vm736, %v656, 1.0
        %v785 = vsel %vm737, %v593, 1.0
        %v786 = vsel %vm738, %v625, 1.0
        %v787 = vsel %vm739, %v657, 1.0
        %v788 = vsel %vm740, %v594, 1.0
        %v789 = vsel %vm741, %v626, 1.0
        %v790 = vsel %vm742, %v658, 1.0
        %v791 = vsel %vm743, %v595, 1.0
        %v792 = vsel %vm744, %v627, 1.0
        %v793 = vsel %vm745, %v659, 1.0
        %v794 = vsel %vm746, %v596, 1.0
        %v795 = vsel %vm747, %v628, 1.0
        %v796 = vsel %vm748, %v660, 1.0
        %v797 = vsel %vm749, %v597, 1.0
        %v798 = vsel %vm750, %v629, 1.0
        %v799 = vsel %vm751, %v661, 1.0
        %v800 = vsel %vm752, %v598, 1.0
        %v801 = vsel %vm753, %v630, 1.0
        %v802 = vsel %vm754, %v662, 1.0
        %v803 = vsel %vm755, %v599, 1.0
        %v804 = vsel %vm756, %v631, 1.0
        %v805 = vsel %vm757, %v663, 1.0
        %v806 = vsel %vm758, %v600, 1.0
        %v807 = vsel %vm759, %v632, 1.0
        %v808 = vsel %vm760, %v664, 1.0
        %v809 = vsel %vm665, %v425, %v761
        %v810 = vsel %vm666, %v426, %v762
        %v811 = vsel %vm667, %v427, %v763
        %v812 = vsel %vm668, %v428, %v764
        %v813 = vsel %vm669, %v429, %v765
        %v814 = vsel %vm670, %v430, %v766
        %v815 = vsel %vm671, %v431, %v767
        %v816 = vsel %vm672, %v432, %v768
        %v817 = vsel %vm673, %v433, %v769
        %v818 = vsel %vm674, %v434, %v770
        %v819 = vsel %vm675, %v435, %v771
        %v820 = vsel %vm676, %v436, %v772
        %v821 = vsel %vm677, %v437, %v773
        %v822 = vsel %vm678, %v438, %v774
        %v823 = vsel %vm679, %v439, %v775
        %v824 = vsel %vm680, %v440, %v776
        %v825 = vsel %vm681, %v441, %v777
        %v826 = vsel %vm682, %v442, %v778
        %v827 = vsel %vm683, %v443, %v779
        %v828 = vsel %vm684, %v444, %v780
        %v829 = vsel %vm685, %v445, %v781
        %v830 = vsel %vm686, %v446, %v782
        %v831 = vsel %vm687, %v447, %v783
        %v832 = vsel %vm688, %v448, %v784
        %v833 = vsel %vm689, %v449, %v785
        %v834 = vsel %vm690, %v450, %v786
        %v835 = vsel %vm691, %v451, %v787
        %v836 = vsel %vm692, %v452, %v788
        %v837 = vsel %vm693, %v453, %v789
        %v838 = vsel %vm694, %v454, %v790
        %v839 = vsel %vm695, %v455, %v791
        %v840 = vsel %vm696, %v456, %v792
        %v841 = vsel %vm697, %v457, %v793
        %v842 = vsel %vm698, %v458, %v794
        %v843 = vsel %vm699, %v459, %v795
        %v844 = vsel %vm700, %v460, %v796
        %v845 = vsel %vm701, %v461, %v797
        %v846 = vsel %vm702, %v462, %v798
        %v847 = vsel %vm703, %v463, %v799
        %v848 = vsel %vm704, %v464, %v800
        %v849 = vsel %vm705, %v465, %v801
        %v850 = vsel %vm706, %v466, %v802
        %v851 = vsel %vm707, %v467, %v803
        %v852 = vsel %vm708, %v468, %v804
        %v853 = vsel %vm709, %v469, %v805
        %v854 = vsel %vm710, %v470, %v806
        %v855 = vsel %vm711, %v471, %v807
        %v856 = vsel %vm712, %v472, %v808
        %v857 = vadd.f32 %v809, %v810
        %v858 = vadd.f32 %v857, %v811
        %859 = vadd.xlane.f32.xlu0 %v858
        %v860 = vpop.xlane.xlu0 %859
        %v861 = vadd.f32 %v812, %v813
        %v862 = vadd.f32 %v861, %v814
        %863 = vadd.xlane.f32.xlu0 %v862
        %v864 = vpop.xlane.xlu0 %863
        %v865 = vadd.f32 %v815, %v816
        %v866 = vadd.f32 %v865, %v817
        %867 = vadd.xlane.f32.xlu0 %v866
        %v868 = vpop.xlane.xlu0 %867
        %v869 = vadd.f32 %v818, %v819
        %v870 = vadd.f32 %v869, %v820
        %871 = vadd.xlane.f32.xlu0 %v870
        %v872 = vpop.xlane.xlu0 %871
        %v873 = vadd.f32 %v821, %v822
        %v874 = vadd.f32 %v873, %v823
        %875 = vadd.xlane.f32.xlu0 %v874
        %v876 = vpop.xlane.xlu0 %875
        %v877 = vadd.f32 %v824, %v825
        %v878 = vadd.f32 %v877, %v826
        %879 = vadd.xlane.f32.xlu0 %v878
        %v880 = vpop.xlane.xlu0 %879
        %v881 = vadd.f32 %v827, %v828
        %v882 = vadd.f32 %v881, %v829
        %883 = vadd.xlane.f32.xlu0 %v882
        %v884 = vpop.xlane.xlu0 %883
        %v885 = vadd.f32 %v830, %v831
        %v886 = vadd.f32 %v885, %v832
        %887 = vadd.xlane.f32.xlu0 %v886
        %v888 = vpop.xlane.xlu0 %887
        %v889 = vadd.f32 %v833, %v834
        %v890 = vadd.f32 %v889, %v835
        %891 = vadd.xlane.f32.xlu0 %v890
        %v892 = vpop.xlane.xlu0 %891
        %v893 = vadd.f32 %v836, %v837
        %v894 = vadd.f32 %v893, %v838
        %895 = vadd.xlane.f32.xlu0 %v894
        %v896 = vpop.xlane.xlu0 %895
        %v897 = vadd.f32 %v839, %v840
        %v898 = vadd.f32 %v897, %v841
        %899 = vadd.xlane.f32.xlu0 %v898
        %v900 = vpop.xlane.xlu0 %899
        %v901 = vadd.f32 %v842, %v843
        %v902 = vadd.f32 %v901, %v844
        %903 = vadd.xlane.f32.xlu0 %v902
        %v904 = vpop.xlane.xlu0 %903
        %v905 = vadd.f32 %v845, %v846
        %v906 = vadd.f32 %v905, %v847
        %907 = vadd.xlane.f32.xlu0 %v906
        %v908 = vpop.xlane.xlu0 %907
        %v909 = vadd.f32 %v848, %v849
        %v910 = vadd.f32 %v909, %v850
        %911 = vadd.xlane.f32.xlu0 %v910
        %v912 = vpop.xlane.xlu0 %911
        %v913 = vadd.f32 %v851, %v852
        %v914 = vadd.f32 %v913, %v853
        %915 = vadd.xlane.f32.xlu0 %v914
        %v916 = vpop.xlane.xlu0 %915
        %v917 = vadd.f32 %v854, %v855
        %v918 = vadd.f32 %v917, %v856
        %919 = vadd.xlane.f32.xlu0 %v918
        %v920 = vpop.xlane.xlu0 %919
        %v921 = vrsqrt.pop %v860
        %v922 = vmul.f32 %v921, %v860
        %v923 = vmul.f32 %v922, %v921
        %v924 = vmul.f32 0.5, %v923
        %v925 = vsub.f32 1.5, %v924
        %v926 = vmul.f32 %v921, %v925
        %vm927 = vweird.f32 %v860
        %vm928 = vweird.f32 %v921
        %vm929 = vmor %vm927, %vm928
        %v930 = vsel %vm929, %v921, %v926
        %v931 = vrsqrt.pop %v864
        %v932 = vmul.f32 %v931, %v864
        %v933 = vmul.f32 %v932, %v931
        %v934 = vmul.f32 0.5, %v933
        %v935 = vsub.f32 1.5, %v934
        %v936 = vmul.f32 %v931, %v935
        %vm937 = vweird.f32 %v864
        %vm938 = vweird.f32 %v931
        %vm939 = vmor %vm937, %vm938
        %v940 = vsel %vm939, %v931, %v936
        %v941 = vrsqrt.pop %v868
        %v942 = vmul.f32 %v941, %v868
        %v943 = vmul.f32 %v942, %v941
        %v944 = vmul.f32 0.5, %v943
        %v945 = vsub.f32 1.5, %v944
        %v946 = vmul.f32 %v941, %v945
        %vm947 = vweird.f32 %v868
        %vm948 = vweird.f32 %v941
        %vm949 = vmor %vm947, %vm948
        %v950 = vsel %vm949, %v941, %v946
        %v951 = vrsqrt.pop %v872
        %v952 = vmul.f32 %v951, %v872
        %v953 = vmul.f32 %v952, %v951
        %v954 = vmul.f32 0.5, %v953
        %v955 = vsub.f32 1.5, %v954
        %v956 = vmul.f32 %v951, %v955
        %vm957 = vweird.f32 %v872
        %vm958 = vweird.f32 %v951
        %vm959 = vmor %vm957, %vm958
        %v960 = vsel %vm959, %v951, %v956
        %v961 = vrsqrt.pop %v876
        %v962 = vmul.f32 %v961, %v876
        %v963 = vmul.f32 %v962, %v961
        %v964 = vmul.f32 0.5, %v963
        %v965 = vsub.f32 1.5, %v964
        %v966 = vmul.f32 %v961, %v965
        %vm967 = vweird.f32 %v876
        %vm968 = vweird.f32 %v961
        %vm969 = vmor %vm967, %vm968
        %v970 = vsel %vm969, %v961, %v966
        %v971 = vrsqrt.pop %v880
        %v972 = vmul.f32 %v971, %v880
        %v973 = vmul.f32 %v972, %v971
        %v974 = vmul.f32 0.5, %v973
        %v975 = vsub.f32 1.5, %v974
        %v976 = vmul.f32 %v971, %v975
        %vm977 = vweird.f32 %v880
        %vm978 = vweird.f32 %v971
        %vm979 = vmor %vm977, %vm978
        %v980 = vsel %vm979, %v971, %v976
        %v981 = vrsqrt.pop %v884
        %v982 = vmul.f32 %v981, %v884
        %v983 = vmul.f32 %v982, %v981
        %v984 = vmul.f32 0.5, %v983
        %v985 = vsub.f32 1.5, %v984
        %v986 = vmul.f32 %v981, %v985
        %vm987 = vweird.f32 %v884
        %vm988 = vweird.f32 %v981
        %vm989 = vmor %vm987, %vm988
        %v990 = vsel %vm989, %v981, %v986
        %v991 = vrsqrt.pop %v888
        %v992 = vmul.f32 %v991, %v888
        %v993 = vmul.f32 %v992, %v991
        %v994 = vmul.f32 0.5, %v993
        %v995 = vsub.f32 1.5, %v994
        %v996 = vmul.f32 %v991, %v995
        %vm997 = vweird.f32 %v888
        %vm998 = vweird.f32 %v991
        %vm999 = vmor %vm997, %vm998
        %v1000 = vsel %vm999, %v991, %v996
        %v1001 = vrsqrt.pop %v892
        %v1002 = vmul.f32 %v1001, %v892
        %v1003 = vmul.f32 %v1002, %v1001
        %v1004 = vmul.f32 0.5, %v1003
        %v1005 = vsub.f32 1.5, %v1004
        %v1006 = vmul.f32 %v1001, %v1005
        %vm1007 = vweird.f32 %v892
        %vm1008 = vweird.f32 %v1001
        %vm1009 = vmor %vm1007, %vm1008
        %v1010 = vsel %vm1009, %v1001, %v1006
        %v1011 = vrsqrt.pop %v896
        %v1012 = vmul.f32 %v1011, %v896
        %v1013 = vmul.f32 %v1012, %v1011
        %v1014 = vmul.f32 0.5, %v1013
        %v1015 = vsub.f32 1.5, %v1014
        %v1016 = vmul.f32 %v1011, %v1015
        %vm1017 = vweird.f32 %v896
        %vm1018 = vweird.f32 %v1011
        %vm1019 = vmor %vm1017, %vm1018
        %v1020 = vsel %vm1019, %v1011, %v1016
        %v1021 = vrsqrt.pop %v900
        %v1022 = vmul.f32 %v1021, %v900
        %v1023 = vmul.f32 %v1022, %v1021
        %v1024 = vmul.f32 0.5, %v1023
        %v1025 = vsub.f32 1.5, %v1024
        %v1026 = vmul.f32 %v1021, %v1025
        %vm1027 = vweird.f32 %v900
        %vm1028 = vweird.f32 %v1021
        %vm1029 = vmor %vm1027, %vm1028
        %v1030 = vsel %vm1029, %v1021, %v1026
        %v1031 = vrsqrt.pop %v904
        %v1032 = vmul.f32 %v1031, %v904
        %v1033 = vmul.f32 %v1032, %v1031
        %v1034 = vmul.f32 0.5, %v1033
        %v1035 = vsub.f32 1.5, %v1034
        %v1036 = vmul.f32 %v1031, %v1035
        %vm1037 = vweird.f32 %v904
        %vm1038 = vweird.f32 %v1031
        %vm1039 = vmor %vm1037, %vm1038
        %v1040 = vsel %vm1039, %v1031, %v1036
        %v1041 = vrsqrt.pop %v908
        %v1042 = vmul.f32 %v1041, %v908
        %v1043 = vmul.f32 %v1042, %v1041
        %v1044 = vmul.f32 0.5, %v1043
        %v1045 = vsub.f32 1.5, %v1044
        %v1046 = vmul.f32 %v1041, %v1045
        %vm1047 = vweird.f32 %v908
        %vm1048 = vweird.f32 %v1041
        %vm1049 = vmor %vm1047, %vm1048
        %v1050 = vsel %vm1049, %v1041, %v1046
        %v1051 = vrsqrt.pop %v912
        %v1052 = vmul.f32 %v1051, %v912
        %v1053 = vmul.f32 %v1052, %v1051
        %v1054 = vmul.f32 0.5, %v1053
        %v1055 = vsub.f32 1.5, %v1054
        %v1056 = vmul.f32 %v1051, %v1055
        %vm1057 = vweird.f32 %v912
        %vm1058 = vweird.f32 %v1051
        %vm1059 = vmor %vm1057, %vm1058
        %v1060 = vsel %vm1059, %v1051, %v1056
        %v1061 = vrsqrt.pop %v916
        %v1062 = vmul.f32 %v1061, %v916
        %v1063 = vmul.f32 %v1062, %v1061
        %v1064 = vmul.f32 0.5, %v1063
        %v1065 = vsub.f32 1.5, %v1064
        %v1066 = vmul.f32 %v1061, %v1065
        %vm1067 = vweird.f32 %v916
        %vm1068 = vweird.f32 %v1061
        %vm1069 = vmor %vm1067, %vm1068
        %v1070 = vsel %vm1069, %v1061, %v1066
        %v1071 = vrsqrt.pop %v920
        %v1072 = vmul.f32 %v1071, %v920
        %v1073 = vmul.f32 %v1072, %v1071
        %v1074 = vmul.f32 0.5, %v1073
        %v1075 = vsub.f32 1.5, %v1074
        %v1076 = vmul.f32 %v1071, %v1075
        %vm1077 = vweird.f32 %v920
        %vm1078 = vweird.f32 %v1071
        %vm1079 = vmor %vm1077, %vm1078
        %v1080 = vsel %vm1079, %v1071, %v1076
        %vm1081 = vcmask 7168
        %1082 = vst.msk [vmem:[%s351] sm:$0xff] %vm1081, %v930
        %1083 = vst.msk [vmem:[%s351 + $0x8] sm:$0xff] %vm1081, %v940
        %1084 = vst.msk [vmem:[%s351 + $0x10] sm:$0xff] %vm1081, %v950
        %1085 = vst.msk [vmem:[%s351 + $0x18] sm:$0xff] %vm1081, %v960
        %1086 = vst.msk [vmem:[%s351 + $0x20] sm:$0xff] %vm1081, %v970
        %1087 = vst.msk [vmem:[%s351 + $0x28] sm:$0xff] %vm1081, %v980
        %1088 = vst.msk [vmem:[%s351 + $0x30] sm:$0xff] %vm1081, %v990
        %1089 = vst.msk [vmem:[%s351 + $0x38] sm:$0xff] %vm1081, %v1000
        %1090 = vst.msk [vmem:[%s351 + $0x40] sm:$0xff] %vm1081, %v1010
        %1091 = vst.msk [vmem:[%s351 + $0x48] sm:$0xff] %vm1081, %v1020
        %1092 = vst.msk [vmem:[%s351 + $0x50] sm:$0xff] %vm1081, %v1030
        %1093 = vst.msk [vmem:[%s351 + $0x58] sm:$0xff] %vm1081, %v1040
        %1094 = vst.msk [vmem:[%s351 + $0x60] sm:$0xff] %vm1081, %v1050
        %1095 = vst.msk [vmem:[%s351 + $0x68] sm:$0xff] %vm1081, %v1060
        %1096 = vst.msk [vmem:[%s351 + $0x70] sm:$0xff] %vm1081, %v1070
        %1097 = vst.msk [vmem:[%s351 + $0x78] sm:$0xff] %vm1081, %v1080
        %v1098 = vmul.f32 %v809, %v930
        %v1099 = vmul.f32 %v810, %v930
        %v1100 = vmul.f32 %v811, %v930
        %v1101 = vmul.f32 %v812, %v940
        %v1102 = vmul.f32 %v813, %v940
        %v1103 = vmul.f32 %v814, %v940
        %v1104 = vmul.f32 %v815, %v950
        %v1105 = vmul.f32 %v816, %v950
        %v1106 = vmul.f32 %v817, %v950
        %v1107 = vmul.f32 %v818, %v960
        %v1108 = vmul.f32 %v819, %v960
        %v1109 = vmul.f32 %v820, %v960
        %v1110 = vmul.f32 %v821, %v970
        %v1111 = vmul.f32 %v822, %v970
        %v1112 = vmul.f32 %v823, %v970
        %v1113 = vmul.f32 %v824, %v980
        %v1114 = vmul.f32 %v825, %v980
        %v1115 = vmul.f32 %v826, %v980
        %v1116 = vmul.f32 %v827, %v990
        %v1117 = vmul.f32 %v828, %v990
        %v1118 = vmul.f32 %v829, %v990
        %v1119 = vmul.f32 %v830, %v1000
        %v1120 = vmul.f32 %v831, %v1000
        %v1121 = vmul.f32 %v832, %v1000
        %v1122 = vmul.f32 %v833, %v1010
        %v1123 = vmul.f32 %v834, %v1010
        %v1124 = vmul.f32 %v835, %v1010
        %v1125 = vmul.f32 %v836, %v1020
        %v1126 = vmul.f32 %v837, %v1020
        %v1127 = vmul.f32 %v838, %v1020
        %v1128 = vmul.f32 %v839, %v1030
        %v1129 = vmul.f32 %v840, %v1030
        %v1130 = vmul.f32 %v841, %v1030
        %v1131 = vmul.f32 %v842, %v1040
        %v1132 = vmul.f32 %v843, %v1040
        %v1133 = vmul.f32 %v844, %v1040
        %v1134 = vmul.f32 %v845, %v1050
        %v1135 = vmul.f32 %v846, %v1050
        %v1136 = vmul.f32 %v847, %v1050
        %v1137 = vmul.f32 %v848, %v1060
        %v1138 = vmul.f32 %v849, %v1060
        %v1139 = vmul.f32 %v850, %v1060
        %v1140 = vmul.f32 %v851, %v1070
        %v1141 = vmul.f32 %v852, %v1070
        %v1142 = vmul.f32 %v853, %v1070
        %v1143 = vmul.f32 %v854, %v1080
        %v1144 = vmul.f32 %v855, %v1080
        %v1145 = vmul.f32 %v856, %v1080
        %v1146 = vpack.c.bf16 %v1099, %v1098
        %v1147 = vpack.c.bf16 %v1100, %v1100
        %v1148 = vpack.c.bf16 %v1102, %v1101
        %v1149 = vpack.c.bf16 %v1103, %v1103
        %v1150 = vpack.c.bf16 %v1105, %v1104
        %v1151 = vpack.c.bf16 %v1106, %v1106
        %v1152 = vpack.c.bf16 %v1108, %v1107
        %v1153 = vpack.c.bf16 %v1109, %v1109
        %v1154 = vpack.c.bf16 %v1111, %v1110
        %v1155 = vpack.c.bf16 %v1112, %v1112
        %v1156 = vpack.c.bf16 %v1114, %v1113
        %v1157 = vpack.c.bf16 %v1115, %v1115
        %v1158 = vpack.c.bf16 %v1117, %v1116
        %v1159 = vpack.c.bf16 %v1118, %v1118
        %v1160 = vpack.c.bf16 %v1120, %v1119
        %v1161 = vpack.c.bf16 %v1121, %v1121
        %v1162 = vpack.c.bf16 %v1123, %v1122
        %v1163 = vpack.c.bf16 %v1124, %v1124
        %v1164 = vpack.c.bf16 %v1126, %v1125
        %v1165 = vpack.c.bf16 %v1127, %v1127
        %v1166 = vpack.c.bf16 %v1129, %v1128
        %v1167 = vpack.c.bf16 %v1130, %v1130
        %v1168 = vpack.c.bf16 %v1132, %v1131
        %v1169 = vpack.c.bf16 %v1133, %v1133
        %v1170 = vpack.c.bf16 %v1135, %v1134
        %v1171 = vpack.c.bf16 %v1136, %v1136
        %v1172 = vpack.c.bf16 %v1138, %v1137
        %v1173 = vpack.c.bf16 %v1139, %v1139
        %v1174 = vpack.c.bf16 %v1141, %v1140
        %v1175 = vpack.c.bf16 %v1142, %v1142
        %v1176 = vpack.c.bf16 %v1144, %v1143
        %v1177 = vpack.c.bf16 %v1145, %v1145
        %1178 = vst [vmem:[%s329] sm:$0xff] %v1146
        %1179 = vst [vmem:[%s329 + $0x8] sm:$0xf] %v1147
        %1180 = vst [vmem:[%s329 + $0xc] sm:$0xff] %v1148
        %1181 = vst [vmem:[%s329 + $0x14] sm:$0xf] %v1149
        %1182 = vst [vmem:[%s329 + $0x18] sm:$0xff] %v1150
        %1183 = vst [vmem:[%s329 + $0x20] sm:$0xf] %v1151
        %1184 = vst [vmem:[%s329 + $0x24] sm:$0xff] %v1152
        %1185 = vst [vmem:[%s329 + $0x2c] sm:$0xf] %v1153
        %1186 = vst [vmem:[%s329 + $0x30] sm:$0xff] %v1154
        %1187 = vst [vmem:[%s329 + $0x38] sm:$0xf] %v1155
        %1188 = vst [vmem:[%s329 + $0x3c] sm:$0xff] %v1156
        %1189 = vst [vmem:[%s329 + $0x44] sm:$0xf] %v1157
        %1190 = vst [vmem:[%s329 + $0x48] sm:$0xff] %v1158
        %1191 = vst [vmem:[%s329 + $0x50] sm:$0xf] %v1159
        %1192 = vst [vmem:[%s329 + $0x54] sm:$0xff] %v1160
        %1193 = vst [vmem:[%s329 + $0x5c] sm:$0xf] %v1161
        %1194 = vst [vmem:[%s329 + $0x60] sm:$0xff] %v1162
        %1195 = vst [vmem:[%s329 + $0x68] sm:$0xf] %v1163
        %1196 = vst [vmem:[%s329 + $0x6c] sm:$0xff] %v1164
        %1197 = vst [vmem:[%s329 + $0x74] sm:$0xf] %v1165
        %1198 = vst [vmem:[%s329 + $0x78] sm:$0xff] %v1166
        %1199 = vst [vmem:[%s329 + $0x80] sm:$0xf] %v1167
        %1200 = vst [vmem:[%s329 + $0x84] sm:$0xff] %v1168
        %1201 = vst [vmem:[%s329 + $0x8c] sm:$0xf] %v1169
        %1202 = vst [vmem:[%s329 + $0x90] sm:$0xff] %v1170
        %1203 = vst [vmem:[%s329 + $0x98] sm:$0xf] %v1171
        %1204 = vst [vmem:[%s329 + $0x9c] sm:$0xff] %v1172
        %1205 = vst [vmem:[%s329 + $0xa4] sm:$0xf] %v1173
        %1206 = vst [vmem:[%s329 + $0xa8] sm:$0xff] %v1174
        %1207 = vst [vmem:[%s329 + $0xb0] sm:$0xf] %v1175
        %1208 = vst [vmem:[%s329 + $0xb4] sm:$0xff] %v1176
        %1209 = vst [vmem:[%s329 + $0xbc] sm:$0xf] %v1177
        %v1210 = vld [vmem:[%s296] sm:$0xff]
        %v1211 = vld [vmem:[%s296 + $0x8] sm:$0xff]
        %v1212 = vld [vmem:[%s296 + $0x10] sm:$0xff]
        %v1213 = vld [vmem:[%s296 + $0x18] sm:$0xff]
        %v1214 = vld [vmem:[%s296 + $0x20] sm:$0xff]
        %v1215 = vld [vmem:[%s296 + $0x28] sm:$0xff]
        %v1216 = vld [vmem:[%s296 + $0x30] sm:$0xff]
        %v1217 = vld [vmem:[%s296 + $0x38] sm:$0xff]
        %v1218 = vld [vmem:[%s296 + $0x40] sm:$0xff]
        %v1219 = vld [vmem:[%s296 + $0x48] sm:$0xff]
        %v1220 = vld [vmem:[%s296 + $0x50] sm:$0xff]
        %v1221 = vld [vmem:[%s296 + $0x58] sm:$0xff]
        %v1222 = vld [vmem:[%s296 + $0x60] sm:$0xff]
        %v1223 = vld [vmem:[%s296 + $0x68] sm:$0xff]
        %v1224 = vld [vmem:[%s296 + $0x70] sm:$0xff]
        %v1225 = vld [vmem:[%s296 + $0x78] sm:$0xff]
        %v1226 = vmul.f32 %v1210, %v930
        %v1227 = vmul.f32 %v1211, %v940
        %v1228 = vmul.f32 %v1212, %v950
        %v1229 = vmul.f32 %v1213, %v960
        %v1230 = vmul.f32 %v1214, %v970
        %v1231 = vmul.f32 %v1215, %v980
        %v1232 = vmul.f32 %v1216, %v990
        %v1233 = vmul.f32 %v1217, %v1000
        %v1234 = vmul.f32 %v1218, %v1010
        %v1235 = vmul.f32 %v1219, %v1020
        %v1236 = vmul.f32 %v1220, %v1030
        %v1237 = vmul.f32 %v1221, %v1040
        %v1238 = vmul.f32 %v1222, %v1050
        %v1239 = vmul.f32 %v1223, %v1060
        %v1240 = vmul.f32 %v1224, %v1070
        %v1241 = vmul.f32 %v1225, %v1080
        %v1242 = vpack.c.bf16 %v1226, %v1226
        %v1243 = vpack.c.bf16 %v1227, %v1227
        %v1244 = vpack.c.bf16 %v1228, %v1228
        %v1245 = vpack.c.bf16 %v1229, %v1229
        %v1246 = vpack.c.bf16 %v1230, %v1230
        %v1247 = vpack.c.bf16 %v1231, %v1231
        %v1248 = vpack.c.bf16 %v1232, %v1232
        %v1249 = vpack.c.bf16 %v1233, %v1233
        %v1250 = vpack.c.bf16 %v1234, %v1234
        %v1251 = vpack.c.bf16 %v1235, %v1235
        %v1252 = vpack.c.bf16 %v1236, %v1236
        %v1253 = vpack.c.bf16 %v1237, %v1237
        %v1254 = vpack.c.bf16 %v1238, %v1238
        %v1255 = vpack.c.bf16 %v1239, %v1239
        %v1256 = vpack.c.bf16 %v1240, %v1240
        %v1257 = vpack.c.bf16 %v1241, %v1241
        %1258 = vst [vmem:[%s343] sm:$0xf] %v1242
        %1259 = vst [vmem:[%s343 + $0x4] sm:$0xf] %v1243
        %1260 = vst [vmem:[%s343 + $0x8] sm:$0xf] %v1244
        %1261 = vst [vmem:[%s343 + $0xc] sm:$0xf] %v1245
        %1262 = vst [vmem:[%s343 + $0x10] sm:$0xf] %v1246
        %1263 = vst [vmem:[%s343 + $0x14] sm:$0xf] %v1247
        %1264 = vst [vmem:[%s343 + $0x18] sm:$0xf] %v1248
        %1265 = vst [vmem:[%s343 + $0x1c] sm:$0xf] %v1249
        %1266 = vst [vmem:[%s343 + $0x20] sm:$0xf] %v1250
        %1267 = vst [vmem:[%s343 + $0x24] sm:$0xf] %v1251
        %1268 = vst [vmem:[%s343 + $0x28] sm:$0xf] %v1252
        %1269 = vst [vmem:[%s343 + $0x2c] sm:$0xf] %v1253
        %1270 = vst [vmem:[%s343 + $0x30] sm:$0xf] %v1254
        %1271 = vst [vmem:[%s343 + $0x34] sm:$0xf] %v1255
        %1272 = vst [vmem:[%s343 + $0x38] sm:$0xf] %v1256
        %1273 = vst [vmem:[%s343 + $0x3c] sm:$0xf] %v1257
        %s1274 = sand.u32 %s115, 1
        %s1275 = scalar_lea.sflag [#allocation4], %s1274
        %s1276 = sand.u32 %s115, 1
        %s1277 = smul.addr %s1276, 192
        %s1278 = scalar_lea.vmem [#allocation8], %s1277
        %s1279 = smul.u32 16, %s29
        %p1280 = scmp.lt.s32.totalorder %s1279, 47
        %s1281 = scalar_select %p1280, %s1279, 47
        %s1282 = smul.addr %s1281, 8
        %s1283 = scalar_lea.vmem %s4, %s1282
        %s1284 = sand.u32 %s167, 1
        %s1285 = scalar_lea.sflag [#allocation10], %s1284
        %s1286 = sand.u32 %s167, 1
        %s1287 = smul.addr %s1286, 64
        %s1288 = scalar_lea.vmem [#allocation9], %s1287
        // Predicated region
        $region45: #{tpu_custom_call.1} parent=31 // pred_check
          %p1289 = pneg %p125
        $region46: #{tpu_custom_call.1} parent=31 // pred_check_branch
          %1291 = sbr.rel (%p1289) target = $region48
        $region47: #{tpu_custom_call.1} parent=31 // pred_region
          %s1292 = smul.u32 16, %s29
          %1294 = vsyncadd %s1275, 0
          %s1295 = smul.addr %s1292, 3
          %s1296 = smul.addr %s1295, 4
          %s1297 = scalar_lea.hbm %s3, %s1296
          %s1298 = sshll.u32 %s1278, 4
          %s1299 = int_to_ptr.vmem [resolvable:$true] %s1298
          %s1300 = sshll.u32 %s1297, 4
          %s1301 = int_to_ptr.hbm [resolvable:$true] %s1300
          %1306 = dma.vmem_to_hbm [thread:$0]  %s1299, 3072, %s1301, %s1275, 192, 192, 12
        $region48: #{tpu_custom_call.1} parent=31 // pred_fallthru
          _
        // Predicated region
        $region49: #{tpu_custom_call.1} parent=31 // pred_check
          %p1307 = pneg %p151
        $region50: #{tpu_custom_call.1} parent=31 // pred_check_branch
          %1309 = sbr.rel (%p1307) target = $region52
        $region51: #{tpu_custom_call.1} parent=31 // pred_region
          %s1310 = smul.u32 16, %s29
        $region52: #{tpu_custom_call.1} parent=31 // pred_fallthru
          _
        // Predicated region
        $region53: #{tpu_custom_call.1} parent=31 // pred_check
          %p1311 = pneg %p177
        $region54: #{tpu_custom_call.1} parent=31 // pred_check_branch
          %1313 = sbr.rel (%p1311) target = $region56
        $region55: #{tpu_custom_call.1} parent=31 // pred_region
          %s1314 = smul.u32 16, %s29
          %1316 = vsyncadd %s1285, 0
          %s1317 = smul.addr %s1314, 4
          %s1318 = scalar_lea.hbm %s5, %s1317
          %s1319 = sshll.u32 %s1288, 4
          %s1320 = int_to_ptr.vmem [resolvable:$true] %s1319
          %s1321 = sshll.u32 %s1318, 4
          %s1322 = int_to_ptr.hbm [resolvable:$true] %s1321
          %1327 = dma.vmem_to_hbm [thread:$0]  %s1320, 1024, %s1322, %s1285, 64, 64, 4
        $region56: #{tpu_custom_call.1} parent=31 // pred_fallthru
          _
      $region32: #{tpu_custom_call.1} parent=5 // pred_fallthru
        _
      %p1328 = scmp.le.s32.totalorder 2, %s24
      // Predicated region
      $region57: #{tpu_custom_call.1} parent=5 // pred_check
        %p1329 = pneg %p1328
      $region58: #{tpu_custom_call.1} parent=5 // pred_check_branch
        %1331 = sbr.rel (%p1329) target = $region60
      $region59: #{tpu_custom_call.1} parent=5 // pred_region
        %s1332 = ssub.s32 %s24, 2
        // Predicated region
        $region61: #{tpu_custom_call.1} parent=59 // pred_check
          %p1333 = pneg %p131
        $region62: #{tpu_custom_call.1} parent=59 // pred_check_branch
          %1335 = sbr.rel (%p1333) target = $region64
        $region63: #{tpu_custom_call.1} parent=59 // pred_region
          %s1336 = sand.u32 %s116, 1
          %s1337 = scalar_lea.sflag [#allocation4], %s1336
          %s1338 = sand.u32 %s116, 1
          %s1339 = smul.addr %s1338, 192
          %s1340 = scalar_lea.vmem [#allocation8], %s1339
          %1342 = dma.done %s1337, 3072
        $region64: #{tpu_custom_call.1} parent=59 // pred_fallthru
          _
        // Predicated region
        $region65: #{tpu_custom_call.1} parent=59 // pred_check
          %p1343 = pneg %p157
        $region66: #{tpu_custom_call.1} parent=59 // pred_check_branch
          %1345 = sbr.rel (%p1343) target = $region68
        $region67: #{tpu_custom_call.1} parent=59 // pred_region
          %s1346 = smul.u32 16, %s30
          %p1347 = scmp.lt.s32.totalorder %s1346, 47
          %s1348 = scalar_select %p1347, %s1346, 47
          %s1349 = smul.addr %s1348, 8
          %s1350 = scalar_lea.vmem %s4, %s1349
        $region68: #{tpu_custom_call.1} parent=59 // pred_fallthru
          _
        // Predicated region
        $region69: #{tpu_custom_call.1} parent=59 // pred_check
          %p1351 = pneg %p183
        $region70: #{tpu_custom_call.1} parent=59 // pred_check_branch
          %1353 = sbr.rel (%p1351) target = $region72
        $region71: #{tpu_custom_call.1} parent=59 // pred_region
          %s1354 = sand.u32 %s168, 1
          %s1355 = scalar_lea.sflag [#allocation10], %s1354
          %s1356 = sand.u32 %s168, 1
          %s1357 = smul.addr %s1356, 64
          %s1358 = scalar_lea.vmem [#allocation9], %s1357
          %1360 = dma.done %s1355, 1024
        $region72: #{tpu_custom_call.1} parent=59 // pred_fallthru
          _
      $region60: #{tpu_custom_call.1} parent=5 // pred_fallthru
        _
    $region6: #{tpu_custom_call.1} parent=1 // loop_footer
      %s28 = sadd.s32 1, %s24
    $region7: #{tpu_custom_call.1} parent=1 // loop_footer_branch
      %23 = sbr.rel target = $region3
    $region8: #{tpu_custom_call.1} parent=1 // loop_exit
      _
    %1361 = vsyncpa [#allocation3], 1
    %s1362 = scalar_lea.sflag [#allocation3], 1
    %1363 = vsyncpa %s1362, 1
    %1364 = vsyncpa [#allocation6], 1
    %s1365 = scalar_lea.sflag [#allocation6], 1
    %1366 = vsyncpa %s1365, 1
    %1367 = vsyncpa [#allocation4], 1
    %s1368 = scalar_lea.sflag [#allocation4], 1
    %1369 = vsyncpa %s1368, 1
    %1370 = vsyncpa [#allocation10], 1
    %s1371 = scalar_lea.sflag [#allocation10], 1
    %1372 = vsyncpa %s1371, 1

</llo_original>
